<compile_context>
chip_gen: v5e
topology: v5e:2x2
jax: 0.10.0
libtpu: 0.0.40
codegen_flags: <defaults>
</compile_context>

<pallas_src>
import functools

import jax
import jax.numpy as jnp
from jax import lax
from jax.experimental import pallas as pl
from jax.experimental.pallas import tpu as pltpu


# ----------------------------------------------------------------------------
# In-kernel helpers
# ----------------------------------------------------------------------------
def _softsort_p2(S, tau):
    """SoftSort_p2 for L independent length-N score rows.

    S: (L, N) float32.  Returns P with P[l, slot, orig] =
      softmax_orig( -(S[l, orig] - sorted_desc(S[l])[slot])**2 / tau ),
    matching SoftSort_p2.forward (sorted *values*; ties carry equal values, so
    tie-break order does not change the result).
    """
    L, N = S.shape
    s_i = S[:, :, None]          # (L, N, 1)
    s_j = S[:, None, :]          # (L, 1, N)
    ii = lax.broadcasted_iota(jnp.int32, (L, N, N), 1)
    jj = lax.broadcasted_iota(jnp.int32, (L, N, N), 2)

    # Descending rank of element i = #(strictly greater) + #(equal, earlier idx)
    before = (s_j > s_i) | ((s_j == s_i) & (jj < ii))
    rank = jnp.sum(jnp.where(before, 1.0, 0.0), axis=2)                  # (L, N)

    # One-hot scatter of values to their sorted (descending) slot.
    rr = jj.astype(jnp.float32)
    onehot = jnp.where(jnp.abs(rank[:, :, None] - rr) < 0.5, 1.0, 0.0)   # (L, i, slot)
    sorted_desc = jnp.sum(onehot * S[:, :, None], axis=1)                # (L, slot)

    # NOTE: no max-subtraction needed — sorted_desc values are exact f32
    # members of S (one-hot construction), so every softmax row's max logit is
    # exactly 0.  Keep this construction in f32 even on the bf16 matmul path.
    diff = S[:, None, :] - sorted_desc[:, :, None]                       # (L, slot, orig)
    e = jnp.exp(-(diff * diff) / tau)
    inv = 1.0 / jnp.sum(e, axis=2, keepdims=True)                        # (L, slot, 1)
    return e * inv
    # TODO(synk): if bundle dumps show XLU saturation at realistic N, move the
    # rank / sorted_desc cross-reductions onto the (idle) MXU via ones-matmuls.


def _esp_head_kernel(qT_ref, kT_ref, v_ref, attn_ref, out_ref, *,
                     tau_eff, temp_eff, use_bf16_matmul):
    # Block = one (batch, head) pair.
    XT = qT_ref[0, 0].astype(jnp.float32)      # (D, N), N lane-dense
    YT = kT_ref[0, 0].astype(jnp.float32)      # (D, N)
    V = v_ref[0, 0].astype(jnp.float32)        # (N, D)
    D, N = XT.shape
    mm = jnp.bfloat16 if use_bf16_matmul else jnp.float32

    # SoftSort over all D feature slices of this head (scale folded into tau).
    Pu = _softsort_p2(XT, tau_eff)             # (D, slot, orig_i)
    Pv = _softsort_p2(YT, tau_eff)             # (D, slot, orig_j)
    Pu_flat = Pu.reshape(D * N, N)
    Pv_flat = Pv.reshape(D * N, N)

    # cost = cdist(X, Y, p=2) on the MXU; x2 via a ones-matmul so it lands in
    # the (N, 1) layout directly (no vector transpose).
    ones_col = jnp.ones((D, 1), jnp.float32)
    x2 = lax.dot_general(XT * XT, ones_col,
                         dimension_numbers=(((0,), (0,)), ((), ())),
                         preferred_element_type=jnp.float32)             # (N, 1)
    y2 = jnp.sum(YT * YT, axis=0, keepdims=True)                         # (1, N)
    xy = lax.dot_general(XT.astype(mm), YT.astype(mm),
                         dimension_numbers=(((0,), (0,)), ((), ())),
                         preferred_element_type=jnp.float32)             # (N, N)
    # TODO(synk): the expand-the-square cdist can lose precision when q/k rows
    # are nearly identical; switch to a direct-difference cdist if that bites.
    cost = jnp.sqrt(jnp.maximum(x2 + y2 - 2.0 * xy, 0.0))                # (N, N)

    # swds[d] = sum_{i,j} cost[i,j] * Gamma[d,i,j] WITHOUT materializing Gamma:
    # contract the orig_i axis on the MXU, then one elementwise + reduce pass.
    CP = lax.dot_general(Pu_flat.astype(mm), cost.astype(mm),
                         dimension_numbers=(((1,), (0,)), ((), ())),
                         preferred_element_type=jnp.float32)             # (D*N, N)
    prod = CP.reshape(D, N, N) * Pv                                      # (D, slot, j)
    swds = jnp.sum(jnp.sum(prod, axis=2), axis=1, keepdims=True)         # (D, 1)

    # Closed-form aggregation weights (softmax over slices), with the final
    # `attn * N` scale folded in so the (N, N) result is never rescaled.
    e = jnp.exp(-temp_eff * (swds - jnp.min(swds, axis=0, keepdims=True)))
    wN = e * (float(N) / jnp.sum(e, axis=0, keepdims=True))              # (D, 1)

    # attn = N * sum_d w[d] * Pu[d]^T @ Pv[d]
    #      = (wN-scaled Pu)^T @ Pv with a single D*N-long contraction.
    PuW = (Pu * wN[:, :, None]).reshape(D * N, N)
    attn = lax.dot_general(PuW.astype(mm), Pv_flat.astype(mm),
                           dimension_numbers=(((0,), (0,)), ((), ())),
                           preferred_element_type=jnp.float32)           # (N, N)

    out = jnp.dot(attn.astype(mm), V.astype(mm),
                  preferred_element_type=jnp.float32)                    # (N, D)

    attn_ref[0, 0] = attn.astype(attn_ref.dtype)   # module returns attn (f32)
    out_ref[0, 0] = out.astype(out_ref.dtype)


# ----------------------------------------------------------------------------
# Pallas wrapper
# ----------------------------------------------------------------------------
def esp_attention_pallas(q, k, v, *, scale, tau=0.001, temperature=0.1,
                         use_bf16_matmul=False):
    """q, k, v: (B, H, N, D) float32.  Returns (attn (B,H,N,N), out (B,H,N,D))."""
    B, H, N, D = q.shape
    # Ship q/k only in the lane-dense transposed layout the softsort needs.
    qT = jnp.swapaxes(q, -1, -2)    # (B, H, D, N)
    kT = jnp.swapaxes(k, -1, -2)    # (B, H, D, N)

    # Fold the `* scale` on q/k into the constants (pure algebra):
    #   softsort(scale*x; tau)      == softsort(x; tau/scale^2)
    #   softmax(-T * (scale*swds))  == softmax(-(T*scale) * swds)
    tau_eff = float(tau / (scale * scale))
    temp_eff = float(temperature * scale)

    kernel = functools.partial(_esp_head_kernel, tau_eff=tau_eff,
                               temp_eff=temp_eff,
                               use_bf16_matmul=use_bf16_matmul)

    attn, out = pl.pallas_call(
        kernel,
        out_shape=(jax.ShapeDtypeStruct((B, H, N, N), jnp.float32),
                   jax.ShapeDtypeStruct((B, H, N, D), jnp.float32)),
        grid=(B, H),
        in_specs=[
            pl.BlockSpec((1, 1, D, N), lambda b, h: (b, h, 0, 0)),   # q^T
            pl.BlockSpec((1, 1, D, N), lambda b, h: (b, h, 0, 0)),   # k^T
            pl.BlockSpec((1, 1, N, D), lambda b, h: (b, h, 0, 0)),   # v
        ],
        out_specs=(
            pl.BlockSpec((1, 1, N, N), lambda b, h: (b, h, 0, 0)),   # attn
            pl.BlockSpec((1, 1, N, D), lambda b, h: (b, h, 0, 0)),   # out
        ),
        compiler_params=pltpu.CompilerParams(
            dimension_semantics=("parallel", "parallel"),
            # Working set is O(D*N^2) f32 per head; raise the scoped-VMEM
            # default (16 MiB v5e / 32 MiB v6e+v7x) but keep headroom under
            # v7x's 64 MiB physical VMEM.
            vmem_limit_bytes=48 * 1024 * 1024),
    )(qT, kT, v)
    return attn, out


def esp_attention_forward(x, w_qkv, w_out, b_out, *, heads, dim_head,
                          tau=0.001, temperature=0.1, use_bf16_matmul=False):
    """Full EspAttention.forward.  x: (B, N, dim).  Returns (out, attn)."""
    B, N, dim = x.shape
    inner = heads * dim_head
    scale = dim_head ** (-0.5)

    qkv = x @ w_qkv.T                              # to_qkv (no bias)
    q, k, v = jnp.split(qkv, 3, axis=-1)

    def to_heads(t):  # 'b n (h d) -> b h n d'
        return jnp.transpose(t.reshape(B, N, heads, dim_head), (0, 2, 1, 3))

    q, k, v = map(to_heads, (q, k, v))

    attn, out = esp_attention_pallas(q, k, v, scale=scale, tau=tau,
                                     temperature=temperature,
                                     use_bf16_matmul=use_bf16_matmul)

    out = jnp.transpose(out, (0, 2, 1, 3)).reshape(B, N, inner)  # 'b h n d -> b n (h d)'
    out = out @ w_out.T + b_out                    # nn.Linear; Dropout(0.0) = identity
    return out, attn


# ----------------------------------------------------------------------------
# Pure-JAX reference (numerical sanity check)
# ----------------------------------------------------------------------------
def _softsort_ref(scores, tau):
    s = jnp.swapaxes(scores, 3, 2)[..., None]          # (B,H,L,N,1)
    sorted_s = -jnp.sort(-s, axis=3)                   # descending
    pd = -((jnp.swapaxes(s, 4, 3) - sorted_s) ** 2) / tau
    return jax.nn.softmax(pd, axis=-1)                 # (B,H,L,N,N)


def esp_attention_reference(x, w_qkv, w_out, b_out, *, heads, dim_head,
                            tau=0.001, temperature=0.1):
    B, N, dim = x.shape
    inner = heads * dim_head
    scale = dim_head ** (-0.5)
    qkv = x @ w_qkv.T
    q, k, v = jnp.split(qkv, 3, axis=-1)

    def to_heads(t):
        return jnp.transpose(t.reshape(B, N, heads, dim_head), (0, 2, 1, 3))

    q, k, v = map(to_heads, (q, k, v))
    X, Y = q * scale, k * scale
    Pu = _softsort_ref(X, tau)
    Pv = _softsort_ref(Y, tau)
    Gamma = jnp.swapaxes(Pu, -1, -2) @ Pv                              # (B,H,L,N,N)
    cost = jnp.sqrt(jnp.sum((X[..., :, None, :] - Y[..., None, :, :]) ** 2, axis=-1))
    swds = jnp.sum(cost[:, :, None] * Gamma, axis=(-1, -2))            # (B,H,L)
    min_swds = jnp.min(swds, axis=-1, keepdims=True)
    e = jnp.exp(-temperature * (swds - min_swds))
    w = e / jnp.sum(e, axis=-1, keepdims=True)
    attn = jnp.sum(Gamma * w[..., None, None], axis=2)                 # (B,H,N,N)
    attn = attn * attn.shape[-1]
    out = attn @ v
    out = jnp.transpose(out, (0, 2, 1, 3)).reshape(B, N, inner)
    return out @ w_out.T + b_out, attn


# ----------------------------------------------------------------------------
if __name__ == "__main__":
    B, N, dim = 2, 8, 32
    heads, dim_head = 4, 8
    inner = heads * dim_head

    key = jax.random.PRNGKey(0)
    k1, k2, k3, k4 = jax.random.split(key, 4)
    x = jax.random.normal(k1, (B, N, dim), jnp.float32)
    w_qkv = jax.random.normal(k2, (3 * inner, dim), jnp.float32) * 0.1   # to_qkv (no bias)
    w_out = jax.random.normal(k3, (dim, inner), jnp.float32) * 0.1       # to_out Linear weight
    b_out = jax.random.normal(k4, (dim,), jnp.float32) * 0.01            # to_out Linear bias

    fwd = jax.jit(functools.partial(esp_attention_forward,
                                    heads=heads, dim_head=dim_head))
    out, attn = fwd(x, w_qkv, w_out, b_out)
    jax.block_until_ready((out, attn))

    ref_out, ref_attn = esp_attention_reference(x, w_qkv, w_out, b_out,
                                                heads=heads, dim_head=dim_head)
    assert out.shape == (B, N, dim) and attn.shape == (B, heads, N, N)
    assert jnp.allclose(attn, ref_attn, atol=5e-4, rtol=5e-4)
    assert jnp.allclose(out, ref_out, atol=5e-4, rtol=5e-4)

    print("KERNEL_OK")
</pallas_src>

<mosaic_0001>
module attributes {stable_mosaic.version = 11 : i64} {
  func.func @_esp_head_kernel(%arg0: i32, %arg1: i32, %arg2: memref<1x1x8x8xf32, #tpu.memory_space<vmem>>, %arg3: memref<1x1x8x8xf32, #tpu.memory_space<vmem>>, %arg4: memref<1x1x8x8xf32, #tpu.memory_space<vmem>>, %arg5: memref<1x1x8x8xf32, #tpu.memory_space<vmem>>, %arg6: memref<1x1x8x8xf32, #tpu.memory_space<vmem>>) attributes {dimension_semantics = [#tpu.dimension_semantics<parallel>, #tpu.dimension_semantics<parallel>], iteration_bounds = array<i64: 2, 4>, scalar_prefetch = 0 : i64, scratch_operands = 0 : i64, tpu.core_type = #tpu.core_type<tc>, window_params = [{transform_indices = @transform_0, window_bounds = array<i64: 1, 1, 8, 8>}, {transform_indices = @transform_1, window_bounds = array<i64: 1, 1, 8, 8>}, {transform_indices = @transform_2, window_bounds = array<i64: 1, 1, 8, 8>}, {transform_indices = @transform_3, window_bounds = array<i64: 1, 1, 8, 8>}, {transform_indices = @transform_4, window_bounds = array<i64: 1, 1, 8, 8>}]} {
    %c0 = arith.constant 0 : index
    %c0_0 = arith.constant 0 : index
    %c0_1 = arith.constant 0 : index
    %c0_2 = arith.constant 0 : index
    %0 = vector.load %arg2[%c0, %c0_0, %c0_1, %c0_2] : memref<1x1x8x8xf32, #tpu.memory_space<vmem>>, vector<1x1x8x8xf32>
    %1 = vector.shape_cast %0 : vector<1x1x8x8xf32> to vector<8x8xf32>
    %c0_3 = arith.constant 0 : index
    %c0_4 = arith.constant 0 : index
    %c0_5 = arith.constant 0 : index
    %c0_6 = arith.constant 0 : index
    %2 = vector.load %arg3[%c0_3, %c0_4, %c0_5, %c0_6] : memref<1x1x8x8xf32, #tpu.memory_space<vmem>>, vector<1x1x8x8xf32>
    %3 = vector.shape_cast %2 : vector<1x1x8x8xf32> to vector<8x8xf32>
    %c0_7 = arith.constant 0 : index
    %c0_8 = arith.constant 0 : index
    %c0_9 = arith.constant 0 : index
    %c0_10 = arith.constant 0 : index
    %4 = vector.load %arg4[%c0_7, %c0_8, %c0_9, %c0_10] : memref<1x1x8x8xf32, #tpu.memory_space<vmem>>, vector<1x1x8x8xf32>
    %5 = vector.shape_cast %4 : vector<1x1x8x8xf32> to vector<8x8xf32>
    %6 = vector.shape_cast %1 : vector<8x8xf32> to vector<8x8x1xf32>
    %7 = vector.shape_cast %1 : vector<8x8xf32> to vector<8x1x8xf32>
    %8 = tpu.iota {dimensions = array<i32: 1>} : vector<8x8x8xi32>
    %9 = tpu.iota {dimensions = array<i32: 2>} : vector<8x8x8xi32>
    %10 = vector.broadcast %7 : vector<8x1x8xf32> to vector<8x8x8xf32>
    %11 = vector.broadcast %6 : vector<8x8x1xf32> to vector<8x8x8xf32>
    %12 = arith.cmpf ogt, %10, %11 : vector<8x8x8xf32>
    %13 = vector.broadcast %7 : vector<8x1x8xf32> to vector<8x8x8xf32>
    %14 = vector.broadcast %6 : vector<8x8x1xf32> to vector<8x8x8xf32>
    %15 = arith.cmpf oeq, %13, %14 : vector<8x8x8xf32>
    %16 = arith.cmpi slt, %9, %8 : vector<8x8x8xi32>
    %17 = arith.andi %15, %16 : vector<8x8x8xi1>
    %18 = arith.ori %12, %17 : vector<8x8x8xi1>
    %cst = arith.constant 1.000000e+00 : f32
    %cst_11 = arith.constant 0.000000e+00 : f32
    %19 = vector.broadcast %cst : f32 to vector<8x8x8xf32>
    %20 = vector.broadcast %cst_11 : f32 to vector<8x8x8xf32>
    %21 = arith.select %18, %19, %20 : vector<8x8x8xi1>, vector<8x8x8xf32>
    %cst_12 = arith.constant dense<0.000000e+00> : vector<8x8xf32>
    %22 = vector.multi_reduction <add>, %21, %cst_12 [2] : vector<8x8x8xf32> to vector<8x8xf32>
    %23 = arith.sitofp %9 : vector<8x8x8xi32> to vector<8x8x8xf32>
    %24 = vector.shape_cast %22 : vector<8x8xf32> to vector<8x8x1xf32>
    %25 = vector.broadcast %24 : vector<8x8x1xf32> to vector<8x8x8xf32>
    %26 = arith.subf %25, %23 : vector<8x8x8xf32>
    %27 = math.absf %26 : vector<8x8x8xf32>
    %cst_13 = arith.constant 5.000000e-01 : f32
    %28 = vector.broadcast %cst_13 : f32 to vector<8x8x8xf32>
    %29 = arith.cmpf olt, %27, %28 : vector<8x8x8xf32>
    %cst_14 = arith.constant 1.000000e+00 : f32
    %cst_15 = arith.constant 0.000000e+00 : f32
    %30 = vector.broadcast %cst_14 : f32 to vector<8x8x8xf32>
    %31 = vector.broadcast %cst_15 : f32 to vector<8x8x8xf32>
    %32 = arith.select %29, %30, %31 : vector<8x8x8xi1>, vector<8x8x8xf32>
    %33 = vector.shape_cast %1 : vector<8x8xf32> to vector<8x8x1xf32>
    %34 = vector.broadcast %33 : vector<8x8x1xf32> to vector<8x8x8xf32>
    %35 = arith.mulf %32, %34 : vector<8x8x8xf32>
    %cst_16 = arith.constant dense<0.000000e+00> : vector<8x8xf32>
    %36 = vector.multi_reduction <add>, %35, %cst_16 [1] : vector<8x8x8xf32> to vector<8x8xf32>
    %37 = vector.shape_cast %1 : vector<8x8xf32> to vector<8x1x8xf32>
    %38 = vector.shape_cast %36 : vector<8x8xf32> to vector<8x8x1xf32>
    %39 = vector.broadcast %37 : vector<8x1x8xf32> to vector<8x8x8xf32>
    %40 = vector.broadcast %38 : vector<8x8x1xf32> to vector<8x8x8xf32>
    %41 = arith.subf %39, %40 : vector<8x8x8xf32>
    %42 = arith.mulf %41, %41 : vector<8x8x8xf32>
    %cst_17 = arith.constant 0.000000e+00 : f32
    %43 = vector.broadcast %cst_17 : f32 to vector<8x8x8xf32>
    %44 = arith.subf %43, %42 : vector<8x8x8xf32>
    %cst_18 = arith.constant 8.000000e-03 : f32
    %45 = vector.broadcast %cst_18 : f32 to vector<8x8x8xf32>
    %46 = arith.divf %44, %45 : vector<8x8x8xf32>
    %47 = math.exp %46 : vector<8x8x8xf32>
    %cst_19 = arith.constant dense<0.000000e+00> : vector<8x8xf32>
    %48 = vector.multi_reduction <add>, %47, %cst_19 [2] : vector<8x8x8xf32> to vector<8x8xf32>
    %49 = vector.shape_cast %48 : vector<8x8xf32> to vector<8x8x1xf32>
    %cst_20 = arith.constant 1.000000e+00 : f32
    %50 = vector.broadcast %cst_20 : f32 to vector<8x8x1xf32>
    %51 = arith.divf %50, %49 : vector<8x8x1xf32>
    %52 = vector.broadcast %51 : vector<8x8x1xf32> to vector<8x8x8xf32>
    %53 = arith.mulf %47, %52 : vector<8x8x8xf32>
    %54 = vector.shape_cast %3 : vector<8x8xf32> to vector<8x8x1xf32>
    %55 = vector.shape_cast %3 : vector<8x8xf32> to vector<8x1x8xf32>
    %56 = tpu.iota {dimensions = array<i32: 1>} : vector<8x8x8xi32>
    %57 = tpu.iota {dimensions = array<i32: 2>} : vector<8x8x8xi32>
    %58 = vector.broadcast %55 : vector<8x1x8xf32> to vector<8x8x8xf32>
    %59 = vector.broadcast %54 : vector<8x8x1xf32> to vector<8x8x8xf32>
    %60 = arith.cmpf ogt, %58, %59 : vector<8x8x8xf32>
    %61 = vector.broadcast %55 : vector<8x1x8xf32> to vector<8x8x8xf32>
    %62 = vector.broadcast %54 : vector<8x8x1xf32> to vector<8x8x8xf32>
    %63 = arith.cmpf oeq, %61, %62 : vector<8x8x8xf32>
    %64 = arith.cmpi slt, %57, %56 : vector<8x8x8xi32>
    %65 = arith.andi %63, %64 : vector<8x8x8xi1>
    %66 = arith.ori %60, %65 : vector<8x8x8xi1>
    %cst_21 = arith.constant 1.000000e+00 : f32
    %cst_22 = arith.constant 0.000000e+00 : f32
    %67 = vector.broadcast %cst_21 : f32 to vector<8x8x8xf32>
    %68 = vector.broadcast %cst_22 : f32 to vector<8x8x8xf32>
    %69 = arith.select %66, %67, %68 : vector<8x8x8xi1>, vector<8x8x8xf32>
    %cst_23 = arith.constant dense<0.000000e+00> : vector<8x8xf32>
    %70 = vector.multi_reduction <add>, %69, %cst_23 [2] : vector<8x8x8xf32> to vector<8x8xf32>
    %71 = arith.sitofp %57 : vector<8x8x8xi32> to vector<8x8x8xf32>
    %72 = vector.shape_cast %70 : vector<8x8xf32> to vector<8x8x1xf32>
    %73 = vector.broadcast %72 : vector<8x8x1xf32> to vector<8x8x8xf32>
    %74 = arith.subf %73, %71 : vector<8x8x8xf32>
    %75 = math.absf %74 : vector<8x8x8xf32>
    %cst_24 = arith.constant 5.000000e-01 : f32
    %76 = vector.broadcast %cst_24 : f32 to vector<8x8x8xf32>
    %77 = arith.cmpf olt, %75, %76 : vector<8x8x8xf32>
    %cst_25 = arith.constant 1.000000e+00 : f32
    %cst_26 = arith.constant 0.000000e+00 : f32
    %78 = vector.broadcast %cst_25 : f32 to vector<8x8x8xf32>
    %79 = vector.broadcast %cst_26 : f32 to vector<8x8x8xf32>
    %80 = arith.select %77, %78, %79 : vector<8x8x8xi1>, vector<8x8x8xf32>
    %81 = vector.shape_cast %3 : vector<8x8xf32> to vector<8x8x1xf32>
    %82 = vector.broadcast %81 : vector<8x8x1xf32> to vector<8x8x8xf32>
    %83 = arith.mulf %80, %82 : vector<8x8x8xf32>
    %cst_27 = arith.constant dense<0.000000e+00> : vector<8x8xf32>
    %84 = vector.multi_reduction <add>, %83, %cst_27 [1] : vector<8x8x8xf32> to vector<8x8xf32>
    %85 = vector.shape_cast %3 : vector<8x8xf32> to vector<8x1x8xf32>
    %86 = vector.shape_cast %84 : vector<8x8xf32> to vector<8x8x1xf32>
    %87 = vector.broadcast %85 : vector<8x1x8xf32> to vector<8x8x8xf32>
    %88 = vector.broadcast %86 : vector<8x8x1xf32> to vector<8x8x8xf32>
    %89 = arith.subf %87, %88 : vector<8x8x8xf32>
    %90 = arith.mulf %89, %89 : vector<8x8x8xf32>
    %cst_28 = arith.constant 0.000000e+00 : f32
    %91 = vector.broadcast %cst_28 : f32 to vector<8x8x8xf32>
    %92 = arith.subf %91, %90 : vector<8x8x8xf32>
    %cst_29 = arith.constant 8.000000e-03 : f32
    %93 = vector.broadcast %cst_29 : f32 to vector<8x8x8xf32>
    %94 = arith.divf %92, %93 : vector<8x8x8xf32>
    %95 = math.exp %94 : vector<8x8x8xf32>
    %cst_30 = arith.constant dense<0.000000e+00> : vector<8x8xf32>
    %96 = vector.multi_reduction <add>, %95, %cst_30 [2] : vector<8x8x8xf32> to vector<8x8xf32>
    %97 = vector.shape_cast %96 : vector<8x8xf32> to vector<8x8x1xf32>
    %cst_31 = arith.constant 1.000000e+00 : f32
    %98 = vector.broadcast %cst_31 : f32 to vector<8x8x1xf32>
    %99 = arith.divf %98, %97 : vector<8x8x1xf32>
    %100 = vector.broadcast %99 : vector<8x8x1xf32> to vector<8x8x8xf32>
    %101 = arith.mulf %95, %100 : vector<8x8x8xf32>
    %102 = vector.shape_cast %53 : vector<8x8x8xf32> to vector<64x8xf32>
    %103 = vector.shape_cast %101 : vector<8x8x8xf32> to vector<64x8xf32>
    %cst_32 = arith.constant 1.000000e+00 : f32
    %104 = vector.broadcast %cst_32 : f32 to vector<8x1xf32>
    %105 = arith.mulf %1, %1 : vector<8x8xf32>
    %cst_33 = arith.constant dense<0.000000e+00> : vector<8x1xf32>
    %106 = tpu.matmul %105, %104, %cst_33 {dimension_numbers = #tpu.dot_dimension_numbers<[0], [0], [1], [1], [0, 1, 1, 1], [], []>} : vector<8x8xf32>, vector<8x1xf32>, vector<8x1xf32> -> vector<8x1xf32>
    %107 = arith.mulf %3, %3 : vector<8x8xf32>
    %cst_34 = arith.constant dense<0.000000e+00> : vector<8xf32>
    %108 = vector.multi_reduction <add>, %107, %cst_34 [0] : vector<8x8xf32> to vector<8xf32>
    %109 = vector.shape_cast %108 : vector<8xf32> to vector<1x8xf32>
    %cst_35 = arith.constant dense<0.000000e+00> : vector<8x8xf32>
    %110 = tpu.matmul %1, %3, %cst_35 {dimension_numbers = #tpu.dot_dimension_numbers<[0], [0], [1], [1], [0, 1, 1, 1], [], []>} : vector<8x8xf32>, vector<8x8xf32>, vector<8x8xf32> -> vector<8x8xf32>
    %111 = vector.broadcast %106 : vector<8x1xf32> to vector<8x8xf32>
    %112 = vector.broadcast %109 : vector<1x8xf32> to vector<8x8xf32>
    %113 = arith.addf %111, %112 : vector<8x8xf32>
    %cst_36 = arith.constant 2.000000e+00 : f32
    %114 = vector.broadcast %cst_36 : f32 to vector<8x8xf32>
    %115 = arith.mulf %114, %110 : vector<8x8xf32>
    %116 = arith.subf %113, %115 : vector<8x8xf32>
    %cst_37 = arith.constant 0.000000e+00 : f32
    %117 = vector.broadcast %cst_37 : f32 to vector<8x8xf32>
    %118 = arith.maximumf %116, %117 : vector<8x8xf32>
    %119 = math.sqrt %118 : vector<8x8xf32>
    %cst_38 = arith.constant dense<0.000000e+00> : vector<64x8xf32>
    %120 = tpu.matmul %102, %119, %cst_38 {dimension_numbers = #tpu.dot_dimension_numbers<[1], [0], [0], [1], [0, 0, 1, 1], [], []>} : vector<64x8xf32>, vector<8x8xf32>, vector<64x8xf32> -> vector<64x8xf32>
    %121 = vector.shape_cast %120 : vector<64x8xf32> to vector<8x8x8xf32>
    %122 = arith.mulf %121, %101 : vector<8x8x8xf32>
    %cst_39 = arith.constant dense<0.000000e+00> : vector<8x8xf32>
    %123 = vector.multi_reduction <add>, %122, %cst_39 [2] : vector<8x8x8xf32> to vector<8x8xf32>
    %cst_40 = arith.constant dense<0.000000e+00> : vector<8xf32>
    %124 = vector.multi_reduction <add>, %123, %cst_40 [1] : vector<8x8xf32> to vector<8xf32>
    %125 = vector.shape_cast %124 : vector<8xf32> to vector<8x1xf32>
    %cst_41 = arith.constant dense<0x7F800000> : vector<1xf32>
    %126 = vector.multi_reduction <minimumf>, %125, %cst_41 [0] : vector<8x1xf32> to vector<1xf32>
    %127 = vector.shape_cast %126 : vector<1xf32> to vector<1x1xf32>
    %128 = vector.broadcast %127 : vector<1x1xf32> to vector<8x1xf32>
    %129 = arith.subf %125, %128 : vector<8x1xf32>
    %cst_42 = arith.constant -0.0353553407 : f32
    %130 = vector.broadcast %cst_42 : f32 to vector<8x1xf32>
    %131 = arith.mulf %130, %129 : vector<8x1xf32>
    %132 = math.exp %131 : vector<8x1xf32>
    %cst_43 = arith.constant dense<0.000000e+00> : vector<1xf32>
    %133 = vector.multi_reduction <add>, %132, %cst_43 [0] : vector<8x1xf32> to vector<1xf32>
    %134 = vector.shape_cast %133 : vector<1xf32> to vector<1x1xf32>
    %cst_44 = arith.constant 8.000000e+00 : f32
    %135 = vector.broadcast %cst_44 : f32 to vector<1x1xf32>
    %136 = arith.divf %135, %134 : vector<1x1xf32>
    %137 = vector.broadcast %136 : vector<1x1xf32> to vector<8x1xf32>
    %138 = arith.mulf %132, %137 : vector<8x1xf32>
    %139 = vector.shape_cast %138 : vector<8x1xf32> to vector<8x1x1xf32>
    %140 = vector.broadcast %139 : vector<8x1x1xf32> to vector<8x8x8xf32>
    %141 = arith.mulf %53, %140 : vector<8x8x8xf32>
    %142 = vector.shape_cast %141 : vector<8x8x8xf32> to vector<64x8xf32>
    %cst_45 = arith.constant dense<0.000000e+00> : vector<8x8xf32>
    %143 = tpu.matmul %142, %103, %cst_45 {dimension_numbers = #tpu.dot_dimension_numbers<[0], [0], [1], [1], [0, 1, 1, 1], [], []>} : vector<64x8xf32>, vector<64x8xf32>, vector<8x8xf32> -> vector<8x8xf32>
    %cst_46 = arith.constant dense<0.000000e+00> : vector<8x8xf32>
    %144 = tpu.matmul %143, %5, %cst_46 {dimension_numbers = #tpu.dot_dimension_numbers<[1], [0], [0], [1], [0, 0, 1, 1], [], []>} : vector<8x8xf32>, vector<8x8xf32>, vector<8x8xf32> -> vector<8x8xf32>
    %c0_47 = arith.constant 0 : index
    %c0_48 = arith.constant 0 : index
    %c0_49 = arith.constant 0 : index
    %c0_50 = arith.constant 0 : index
    %145 = vector.load %arg5[%c0_47, %c0_48, %c0_49, %c0_50] : memref<1x1x8x8xf32, #tpu.memory_space<vmem>>, vector<1x1x8x8xf32>
    %146 = vector.shape_cast %145 : vector<1x1x8x8xf32> to vector<8x8xf32>
    %147 = vector.shape_cast %143 : vector<8x8xf32> to vector<1x1x8x8xf32>
    tpu.vector_store %arg5[%c0_47, %c0_48, %c0_49, %c0_50], %147 {strides = array<i32>} : memref<1x1x8x8xf32, #tpu.memory_space<vmem>>, vector<1x1x8x8xf32>,
    %c0_51 = arith.constant 0 : index
    %c0_52 = arith.constant 0 : index
    %c0_53 = arith.constant 0 : index
    %c0_54 = arith.constant 0 : index
    %148 = vector.load %arg6[%c0_51, %c0_52, %c0_53, %c0_54] : memref<1x1x8x8xf32, #tpu.memory_space<vmem>>, vector<1x1x8x8xf32>
    %149 = vector.shape_cast %148 : vector<1x1x8x8xf32> to vector<8x8xf32>
    %150 = vector.shape_cast %144 : vector<8x8xf32> to vector<1x1x8x8xf32>
    tpu.vector_store %arg6[%c0_51, %c0_52, %c0_53, %c0_54], %150 {strides = array<i32>} : memref<1x1x8x8xf32, #tpu.memory_space<vmem>>, vector<1x1x8x8xf32>,
    return
  }
  func.func @transform_0(%arg0: i32, %arg1: i32) -> (i32, i32, i32, i32) {
    %c0_i32 = arith.constant 0 : i32
    %c0_i32_0 = arith.constant 0 : i32
    %c0_i32_1 = arith.constant 0 : i32
    return %arg0, %arg1, %c0_i32, %c0_i32_0 : i32, i32, i32, i32
  }
  func.func @transform_1(%arg0: i32, %arg1: i32) -> (i32, i32, i32, i32) {
    %c0_i32 = arith.constant 0 : i32
    %c0_i32_0 = arith.constant 0 : i32
    %c0_i32_1 = arith.constant 0 : i32
    return %arg0, %arg1, %c0_i32, %c0_i32_0 : i32, i32, i32, i32
  }
  func.func @transform_2(%arg0: i32, %arg1: i32) -> (i32, i32, i32, i32) {
    %c0_i32 = arith.constant 0 : i32
    %c0_i32_0 = arith.constant 0 : i32
    %c0_i32_1 = arith.constant 0 : i32
    return %arg0, %arg1, %c0_i32, %c0_i32_0 : i32, i32, i32, i32
  }
  func.func @transform_3(%arg0: i32, %arg1: i32) -> (i32, i32, i32, i32) {
    %c0_i32 = arith.constant 0 : i32
    %c0_i32_0 = arith.constant 0 : i32
    %c0_i32_1 = arith.constant 0 : i32
    return %arg0, %arg1, %c0_i32, %c0_i32_0 : i32, i32, i32, i32
  }
  func.func @transform_4(%arg0: i32, %arg1: i32) -> (i32, i32, i32, i32) {
    %c0_i32 = arith.constant 0 : i32
    %c0_i32_0 = arith.constant 0 : i32
    %c0_i32_1 = arith.constant 0 : i32
    return %arg0, %arg1, %c0_i32, %c0_i32_0 : i32, i32, i32, i32
  }
}

</mosaic_0001>

<llo_original>
// kernel: esp_attention_forward.1
$region0: #{esp_attention_forward.1}
  #allocation0 [shape = 'u32[]', space=smem, size = 0x4, offset = 0x4, fixed_abs, tag = 'smem constant byte address 0x4 - core index']
  #allocation1 [shape = 'u32[72,128]{1,0:T(1,128)}', space=vmem, size = 0x9000, scoped, tag = 'internal scratch']
  %s0 = inlined_call_operand.vmem [shape: f32[2,4,8,8], index: 0, kind: input, shape index: {}]
  %s1 = inlined_call_operand.vmem [shape: f32[2,4,8,8], index: 1, kind: input, shape index: {}]
  %s2 = inlined_call_operand.vmem [shape: f32[2,4,8,8], index: 2, kind: input, shape index: {}]
  %s3 = inlined_call_operand.hbm [shape: f32[2,4,8,8], index: 3, kind: output, shape index: {0}]
  %s4 = inlined_call_operand.vmem [shape: f32[2,4,8,8], index: 4, kind: output, shape index: {1}]
  %5 = xla_tuple %s3, %s4
  %s6 = sld [smem:[#allocation0]]
  $region53: #{esp_attention_forward.1} parent=0
    _
  %s8 = ssub.s32 1, %s6
  %s9 = scalar_select 0, %s8, %s6
  $region1: #{esp_attention_forward.1} parent=0
    #allocation2 [shape = 'u8[8192]{0}', space=vmem, size = 0x2000, scoped, tag = 'output window, operand 0']
    #allocation3 [shape = 's32[2]{0}', space=sflag, size = 0x8, scoped, tag = 'scoped memory for esp_attention_forward.1']
    %10 = vsyncpa [#allocation3], 0
    %s11 = scalar_lea.sflag [#allocation3], 1
    %12 = vsyncpa %s11, 0
    loop: start=0, step=1, limit=10
    $region2: #{esp_attention_forward.1} parent=1 // loop_pre_header
      _
    $region3: #{esp_attention_forward.1} parent=1 // loop_header
      %s14 = sphi 0, %s18
      %p15 = scmp.ge.s32.totalorder %s14, 10
      %s21 = sphi 0, %s33
      %s22 = sphi 0, %s29
      %s23 = sphi 0, %s21
      %s24 = sphi 0, %s22
      %s25 = sphi 0, %s23
      %s26 = sphi 0, %s24
      %s38 = sphi 0, %s40
      %s41 = sphi 0, %s38
      %s42 = sphi 0, %s41
      %s58 = sphi 0, %s42
      %s66 = sphi 0, %s68
      %s69 = sphi 0, %s66
      %s70 = sphi 0, %s69
      %s86 = sphi 0, %s70
      %s94 = sphi 0, %s96
      %s97 = sphi 0, %s94
      %s98 = sphi 0, %s97
      %s114 = sphi 0, %s98
      %s122 = sphi 0, %s124
      %s125 = sphi 0, %s122
      %s126 = sphi 0, %s125
      %s142 = sphi 0, %s126
      %s150 = sphi 0, %s152
      %s153 = sphi 0, %s150
      %s154 = sphi 0, %s153
      %s170 = sphi 0, %s154
    $region4: #{esp_attention_forward.1} parent=1 // loop_header_branch
      %17 = sbr.rel (%p15) target = $region8
    $region5: #{esp_attention_forward.1} parent=1 // loop_body
      %s19 = ssub.s32 %s14, 1
      %s20 = ssub.s32 %s14, 2
      %s27 = sadd.s32 1, %s22
      %p28 = scmp.ge.s32.totalorder %s27, 4
      %s29 = scalar_select %p28, 0, %s27
      %s30 = sadd.s32 1, %s21
      %s31 = scalar_select %p28, %s30, %s21
      %p32 = scmp.ge.s32.totalorder %s31, 2
      %s33 = scalar_select %p32, 0, %s31
      %s34 = ssub.s32 %s21, %s33
      %s35 = ssub.s32 %s22, %s29
      %s36 = sor.u32 %s34, %s35
      %p37 = scmp.eq.s32.totalorder %s36, 0
      %s39 = sadd.s32 %s38, 1
      %s40 = scalar_select %p37, %s38, %s39
      %p43 = pneg %p37
      %p44 = scmp.eq.s32.totalorder %s14, 7
      %p45 = por %p43, %p44
      %p46 = scmp.ne.s32.totalorder %s38, %s41
      %p47 = scmp.eq.s32.totalorder %s14, 0
      %p48 = por %p46, %p47
      %p49 = scmp.ne.s32.totalorder %s38, %s41
      %p50 = scmp.eq.s32.totalorder %s19, 7
      %p51 = por %p49, %p50
      %p52 = scmp.ne.s32.totalorder %s41, %s42
      %p53 = scmp.eq.s32.totalorder %s19, 0
      %p54 = por %p52, %p53
      %p55 = scmp.ne.s32.totalorder %s41, %s42
      %p56 = scmp.eq.s32.totalorder %s20, 7
      %p57 = por %p55, %p56
      %p59 = scmp.ne.s32.totalorder %s42, %s58
      %p60 = scmp.eq.s32.totalorder %s20, 0
      %p61 = por %p59, %p60
      %s62 = ssub.s32 %s21, %s33
      %s63 = ssub.s32 %s22, %s29
      %s64 = sor.u32 %s62, %s63
      %p65 = scmp.eq.s32.totalorder %s64, 0
      %s67 = sadd.s32 %s66, 1
      %s68 = scalar_select %p65, %s66, %s67
      %p71 = pneg %p65
      %p72 = scmp.eq.s32.totalorder %s14, 7
      %p73 = por %p71, %p72
      %p74 = scmp.ne.s32.totalorder %s66, %s69
      %p75 = scmp.eq.s32.totalorder %s14, 0
      %p76 = por %p74, %p75
      %p77 = scmp.ne.s32.totalorder %s66, %s69
      %p78 = scmp.eq.s32.totalorder %s19, 7
      %p79 = por %p77, %p78
      %p80 = scmp.ne.s32.totalorder %s69, %s70
      %p81 = scmp.eq.s32.totalorder %s19, 0
      %p82 = por %p80, %p81
      %p83 = scmp.ne.s32.totalorder %s69, %s70
      %p84 = scmp.eq.s32.totalorder %s20, 7
      %p85 = por %p83, %p84
      %p87 = scmp.ne.s32.totalorder %s70, %s86
      %p88 = scmp.eq.s32.totalorder %s20, 0
      %p89 = por %p87, %p88
      %s90 = ssub.s32 %s21, %s33
      %s91 = ssub.s32 %s22, %s29
      %s92 = sor.u32 %s90, %s91
      %p93 = scmp.eq.s32.totalorder %s92, 0
      %s95 = sadd.s32 %s94, 1
      %s96 = scalar_select %p93, %s94, %s95
      %p99 = pneg %p93
      %p100 = scmp.eq.s32.totalorder %s14, 7
      %p101 = por %p99, %p100
      %p102 = scmp.ne.s32.totalorder %s94, %s97
      %p103 = scmp.eq.s32.totalorder %s14, 0
      %p104 = por %p102, %p103
      %p105 = scmp.ne.s32.totalorder %s94, %s97
      %p106 = scmp.eq.s32.totalorder %s19, 7
      %p107 = por %p105, %p106
      %p108 = scmp.ne.s32.totalorder %s97, %s98
      %p109 = scmp.eq.s32.totalorder %s19, 0
      %p110 = por %p108, %p109
      %p111 = scmp.ne.s32.totalorder %s97, %s98
      %p112 = scmp.eq.s32.totalorder %s20, 7
      %p113 = por %p111, %p112
      %p115 = scmp.ne.s32.totalorder %s98, %s114
      %p116 = scmp.eq.s32.totalorder %s20, 0
      %p117 = por %p115, %p116
      %s118 = ssub.s32 %s21, %s33
      %s119 = ssub.s32 %s22, %s29
      %s120 = sor.u32 %s118, %s119
      %p121 = scmp.eq.s32.totalorder %s120, 0
      %s123 = sadd.s32 %s122, 1
      %s124 = scalar_select %p121, %s122, %s123
      %p127 = pneg %p121
      %p128 = scmp.eq.s32.totalorder %s14, 7
      %p129 = por %p127, %p128
      %p130 = scmp.ne.s32.totalorder %s122, %s125
      %p131 = scmp.eq.s32.totalorder %s14, 0
      %p132 = por %p130, %p131
      %p133 = scmp.ne.s32.totalorder %s122, %s125
      %p134 = scmp.eq.s32.totalorder %s19, 7
      %p135 = por %p133, %p134
      %p136 = scmp.ne.s32.totalorder %s125, %s126
      %p137 = scmp.eq.s32.totalorder %s19, 0
      %p138 = por %p136, %p137
      %p139 = scmp.ne.s32.totalorder %s125, %s126
      %p140 = scmp.eq.s32.totalorder %s20, 7
      %p141 = por %p139, %p140
      %p143 = scmp.ne.s32.totalorder %s126, %s142
      %p144 = scmp.eq.s32.totalorder %s20, 0
      %p145 = por %p143, %p144
      %s146 = ssub.s32 %s21, %s33
      %s147 = ssub.s32 %s22, %s29
      %s148 = sor.u32 %s146, %s147
      %p149 = scmp.eq.s32.totalorder %s148, 0
      %s151 = sadd.s32 %s150, 1
      %s152 = scalar_select %p149, %s150, %s151
      %p155 = pneg %p149
      %p156 = scmp.eq.s32.totalorder %s14, 7
      %p157 = por %p155, %p156
      %p158 = scmp.ne.s32.totalorder %s150, %s153
      %p159 = scmp.eq.s32.totalorder %s14, 0
      %p160 = por %p158, %p159
      %p161 = scmp.ne.s32.totalorder %s150, %s153
      %p162 = scmp.eq.s32.totalorder %s19, 7
      %p163 = por %p161, %p162
      %p164 = scmp.ne.s32.totalorder %s153, %s154
      %p165 = scmp.eq.s32.totalorder %s19, 0
      %p166 = por %p164, %p165
      %p167 = scmp.ne.s32.totalorder %s153, %s154
      %p168 = scmp.eq.s32.totalorder %s20, 7
      %p169 = por %p167, %p168
      %p171 = scmp.ne.s32.totalorder %s154, %s170
      %p172 = scmp.eq.s32.totalorder %s20, 0
      %p173 = por %p171, %p172
      %p174 = scmp.le.s32.totalorder 1, %s14
      %p175 = scmp.lt.s32.totalorder %s14, 9
      %p176 = pnand %p174, %p175
      %p177 = pneg %p176
      // Predicated region
      $region9: #{esp_attention_forward.1} parent=5 // pred_check
        _
      $region10: #{esp_attention_forward.1} parent=5 // pred_check_branch
        %179 = sbr.rel (%p176) target = $region12
      $region11: #{esp_attention_forward.1} parent=5 // pred_region
        %s180 = ssub.s32 %s14, 1
      $region12: #{esp_attention_forward.1} parent=5 // pred_fallthru
        _
      %p181 = scmp.lt.s32.totalorder %s14, 8
      // Predicated region
      $region13: #{esp_attention_forward.1} parent=5 // pred_check
        %p182 = pneg %p181
      $region14: #{esp_attention_forward.1} parent=5 // pred_check_branch
        %184 = sbr.rel (%p182) target = $region16
      $region15: #{esp_attention_forward.1} parent=5 // pred_region
        // Predicated region
        $region17: #{esp_attention_forward.1} parent=15 // pred_check
          %p185 = pneg %p48
        $region18: #{esp_attention_forward.1} parent=15 // pred_check_branch
          %187 = sbr.rel (%p185) target = $region20
        $region19: #{esp_attention_forward.1} parent=15 // pred_region
          %p188 = scmp.lt.s32.totalorder %s21, 1
          %s189 = scalar_select %p188, %s21, 1
          %p190 = scmp.lt.s32.totalorder %s22, 3
          %s191 = scalar_select %p190, %s22, 3
          %s192 = smul.addr %s189, 4
          %s193 = sadd.s32 %s191, %s192
          %s194 = smul.addr %s193, 8
          %s195 = scalar_lea.vmem %s0, %s194
        $region20: #{esp_attention_forward.1} parent=15 // pred_fallthru
          _
        // Predicated region
        $region21: #{esp_attention_forward.1} parent=15 // pred_check
          %p196 = pneg %p76
        $region22: #{esp_attention_forward.1} parent=15 // pred_check_branch
          %198 = sbr.rel (%p196) target = $region24
        $region23: #{esp_attention_forward.1} parent=15 // pred_region
          %p199 = scmp.lt.s32.totalorder %s21, 1
          %s200 = scalar_select %p199, %s21, 1
          %p201 = scmp.lt.s32.totalorder %s22, 3
          %s202 = scalar_select %p201, %s22, 3
          %s203 = smul.addr %s200, 4
          %s204 = sadd.s32 %s202, %s203
          %s205 = smul.addr %s204, 8
          %s206 = scalar_lea.vmem %s1, %s205
        $region24: #{esp_attention_forward.1} parent=15 // pred_fallthru
          _
        // Predicated region
        $region25: #{esp_attention_forward.1} parent=15 // pred_check
          %p207 = pneg %p104
        $region26: #{esp_attention_forward.1} parent=15 // pred_check_branch
          %209 = sbr.rel (%p207) target = $region28
        $region27: #{esp_attention_forward.1} parent=15 // pred_region
          %p210 = scmp.lt.s32.totalorder %s21, 1
          %s211 = scalar_select %p210, %s21, 1
          %p212 = scmp.lt.s32.totalorder %s22, 3
          %s213 = scalar_select %p212, %s22, 3
          %s214 = smul.addr %s211, 4
          %s215 = sadd.s32 %s213, %s214
          %s216 = smul.addr %s215, 8
          %s217 = scalar_lea.vmem %s2, %s216
        $region28: #{esp_attention_forward.1} parent=15 // pred_fallthru
          _
      $region16: #{esp_attention_forward.1} parent=5 // pred_fallthru
        _
      %p218 = scmp.le.s32.totalorder 1, %s14
      %p219 = scmp.lt.s32.totalorder %s14, 9
      %p220 = pnand %p218, %p219
      %p221 = pneg %p220
      // Predicated region
      $region29: #{esp_attention_forward.1} parent=5 // pred_check
        _
      $region30: #{esp_attention_forward.1} parent=5 // pred_check_branch
        %223 = sbr.rel (%p220) target = $region32
      $region31: #{esp_attention_forward.1} parent=5 // pred_region
        %s224 = ssub.s32 %s14, 1
        %p225 = scmp.lt.s32.totalorder %s23, 1
        %s226 = scalar_select %p225, %s23, 1
        %p227 = scmp.lt.s32.totalorder %s24, 3
        %s228 = scalar_select %p227, %s24, 3
        %s229 = smul.addr %s226, 4
        %s230 = sadd.s32 %s228, %s229
        %s231 = smul.addr %s230, 8
        %s232 = scalar_lea.vmem %s0, %s231
        %p233 = pneg %p54
        %p234 = pneg %p51
        %p235 = scmp.lt.s32.totalorder %s23, 1
        %s236 = scalar_select %p235, %s23, 1
        %p237 = scmp.lt.s32.totalorder %s24, 3
        %s238 = scalar_select %p237, %s24, 3
        %s239 = smul.addr %s236, 4
        %s240 = sadd.s32 %s238, %s239
        %s241 = smul.addr %s240, 8
        %s242 = scalar_lea.vmem %s1, %s241
        %p243 = pneg %p82
        %p244 = pneg %p79
        %p245 = scmp.lt.s32.totalorder %s23, 1
        %s246 = scalar_select %p245, %s23, 1
        %p247 = scmp.lt.s32.totalorder %s24, 3
        %s248 = scalar_select %p247, %s24, 3
        %s249 = smul.addr %s246, 4
        %s250 = sadd.s32 %s248, %s249
        %s251 = smul.addr %s250, 8
        %s252 = scalar_lea.vmem %s2, %s251
        %p253 = pneg %p110
        %p254 = pneg %p107
        %p255 = pneg %p138
        %p256 = pneg %p135
        %s257 = sand.u32 %s125, 1
        %s258 = scalar_lea.sflag [#allocation3], %s257
        %s259 = sand.u32 %s125, 1
        %s260 = smul.addr %s259, 8
        %s261 = scalar_lea.vmem [#allocation2], %s260
        %p262 = pneg %p166
        %p263 = pneg %p163
        %p264 = scmp.lt.s32.totalorder %s23, 1
        %s265 = scalar_select %p264, %s23, 1
        %p266 = scmp.lt.s32.totalorder %s24, 3
        %s267 = scalar_select %p266, %s24, 3
        %s268 = smul.addr %s265, 4
        %s269 = sadd.s32 %s267, %s268
        %s270 = smul.addr %s269, 8
        %s271 = scalar_lea.vmem %s4, %s270
        %p272 = scmp.lt.s32.totalorder %s23, 1
        %s273 = scalar_select %p272, %s23, 1
        %p274 = scmp.lt.s32.totalorder %s24, 3
        %s275 = scalar_select %p274, %s24, 3
        %s276 = smul.addr %s273, 4
        %s277 = sadd.s32 %s275, %s276
        %s278 = smul.addr %s277, 8
        %s279 = scalar_lea.vmem %s0, %s278
        %p280 = scmp.lt.s32.totalorder %s23, 1
        %s281 = scalar_select %p280, %s23, 1
        %p282 = scmp.lt.s32.totalorder %s24, 3
        %s283 = scalar_select %p282, %s24, 3
        %s284 = smul.addr %s281, 4
        %s285 = sadd.s32 %s283, %s284
        %s286 = smul.addr %s285, 8
        %s287 = scalar_lea.vmem %s1, %s286
        %p288 = scmp.lt.s32.totalorder %s23, 1
        %s289 = scalar_select %p288, %s23, 1
        %p290 = scmp.lt.s32.totalorder %s24, 3
        %s291 = scalar_select %p290, %s24, 3
        %s292 = smul.addr %s289, 4
        %s293 = sadd.s32 %s291, %s292
        %s294 = smul.addr %s293, 8
        %s295 = scalar_lea.vmem %s2, %s294
        %p296 = scmp.lt.s32.totalorder %s23, 1
        %s297 = scalar_select %p296, %s23, 1
        %p298 = scmp.lt.s32.totalorder %s24, 3
        %s299 = scalar_select %p298, %s24, 3
        %s300 = smul.addr %s297, 4
        %s301 = sadd.s32 %s299, %s300
        %s302 = smul.addr %s301, 8
        %s303 = scalar_lea.vmem %s4, %s302
        %v304 = vld [vmem:[%s279] sm:$0xff]
        %v305 = vld [vmem:[%s287] sm:$0xff]
        %v306 = vld [vmem:[%s295] sm:$0xff]
        %v307 = vperm.slane %v304, 0
        %v308 = vlaneseq
        %v309 = vshrl.u32 %v308, 7
        %311 = vset.pattern.permute.xlu0 %v309
        %312 = vperm.xlu0 %311, %v307
        %v313 = vpop.permute.xlu0 %312
        %v314 = vperm.slane %v304, 1
        %v315 = vlaneseq
        %v316 = vshrl.u32 %v315, 7
        %318 = vset.pattern.permute.xlu0 %v316
        %319 = vperm.xlu0 %318, %v314
        %v320 = vpop.permute.xlu0 %319
        %v321 = vperm.slane %v304, 2
        %v322 = vlaneseq
        %v323 = vshrl.u32 %v322, 7
        %325 = vset.pattern.permute.xlu0 %v323
        %326 = vperm.xlu0 %325, %v321
        %v327 = vpop.permute.xlu0 %326
        %v328 = vperm.slane %v304, 3
        %v329 = vlaneseq
        %v330 = vshrl.u32 %v329, 7
        %332 = vset.pattern.permute.xlu0 %v330
        %333 = vperm.xlu0 %332, %v328
        %v334 = vpop.permute.xlu0 %333
        %v335 = vperm.slane %v304, 4
        %v336 = vlaneseq
        %v337 = vshrl.u32 %v336, 7
        %339 = vset.pattern.permute.xlu0 %v337
        %340 = vperm.xlu0 %339, %v335
        %v341 = vpop.permute.xlu0 %340
        %v342 = vperm.slane %v304, 5
        %v343 = vlaneseq
        %v344 = vshrl.u32 %v343, 7
        %346 = vset.pattern.permute.xlu0 %v344
        %347 = vperm.xlu0 %346, %v342
        %v348 = vpop.permute.xlu0 %347
        %v349 = vperm.slane %v304, 6
        %v350 = vlaneseq
        %v351 = vshrl.u32 %v350, 7
        %353 = vset.pattern.permute.xlu0 %v351
        %354 = vperm.xlu0 %353, %v349
        %v355 = vpop.permute.xlu0 %354
        %v356 = vperm.slane %v304, 7
        %v357 = vlaneseq
        %v358 = vshrl.u32 %v357, 7
        %360 = vset.pattern.permute.xlu0 %v358
        %361 = vperm.xlu0 %360, %v356
        %v362 = vpop.permute.xlu0 %361
        %v364 = vrot.slane %v304, 1
        %v365 = vrot.slane %v304, 2
        %v366 = vrot.slane %v304, 3
        %v367 = vrot.slane %v304, 4
        %v368 = vrot.slane %v304, 5
        %v369 = vrot.slane %v304, 6
        %v370 = vrot.slane %v304, 7
        %v371 = vlaneseq
        %v372 = vshrl.u32 %v371, 7
        %v373 = vlaneseq
        %v374 = vand.u32 %v373, 127
        %v375 = vperm.slane %v304, 0
        %v376 = vperm.slane %v364, 0
        %v377 = vperm.slane %v365, 0
        %v378 = vperm.slane %v366, 0
        %v379 = vperm.slane %v367, 0
        %v380 = vperm.slane %v368, 0
        %v381 = vperm.slane %v369, 0
        %v382 = vperm.slane %v370, 0
        %vm391 = vcmp.gt.f32.partialorder %v375, %v313
        %vm392 = vcmp.gt.f32.partialorder %v376, %v320
        %vm393 = vcmp.gt.f32.partialorder %v377, %v327
        %vm394 = vcmp.gt.f32.partialorder %v378, %v334
        %vm395 = vcmp.gt.f32.partialorder %v379, %v341
        %vm396 = vcmp.gt.f32.partialorder %v380, %v348
        %vm397 = vcmp.gt.f32.partialorder %v381, %v355
        %vm398 = vcmp.gt.f32.partialorder %v382, %v362
        %vm399 = vcmp.eq.f32.partialorder %v375, %v313
        %vm400 = vcmp.eq.f32.partialorder %v376, %v320
        %vm401 = vcmp.eq.f32.partialorder %v377, %v327
        %vm402 = vcmp.eq.f32.partialorder %v378, %v334
        %vm403 = vcmp.eq.f32.partialorder %v379, %v341
        %vm404 = vcmp.eq.f32.partialorder %v380, %v348
        %vm405 = vcmp.eq.f32.partialorder %v381, %v355
        %vm406 = vcmp.eq.f32.partialorder %v382, %v362
        %vm407 = vcmp.lt.s32.totalorder %v374, %v372
        %vm408 = vmand %vm399, %vm407
        %vm409 = vmand %vm400, %vm407
        %vm410 = vmand %vm401, %vm407
        %vm411 = vmand %vm402, %vm407
        %vm412 = vmand %vm403, %vm407
        %vm413 = vmand %vm404, %vm407
        %vm414 = vmand %vm405, %vm407
        %vm415 = vmand %vm406, %vm407
        %vm416 = vmor %vm391, %vm408
        %vm417 = vmor %vm392, %vm409
        %vm418 = vmor %vm393, %vm410
        %vm419 = vmor %vm394, %vm411
        %vm420 = vmor %vm395, %vm412
        %vm421 = vmor %vm396, %vm413
        %vm422 = vmor %vm397, %vm414
        %vm423 = vmor %vm398, %vm415
        %v424 = vsel %vm416, 1.0, 0.0
        %v425 = vsel %vm417, 1.0, 0.0
        %v426 = vsel %vm418, 1.0, 0.0
        %v427 = vsel %vm419, 1.0, 0.0
        %v428 = vsel %vm420, 1.0, 0.0
        %v429 = vsel %vm421, 1.0, 0.0
        %v430 = vsel %vm422, 1.0, 0.0
        %v431 = vsel %vm423, 1.0, 0.0
        %vm432 = vcmask 64512
        %v433 = vsel %vm432, %v424, 0.0
        %434 = vadd.xlane.f32.xlu0 %v433
        %v435 = vpop.xlane.xlu0 %434
        %v436 = vsel %vm432, %v425, 0.0
        %437 = vadd.xlane.f32.xlu0 %v436
        %v438 = vpop.xlane.xlu0 %437
        %v439 = vsel %vm432, %v426, 0.0
        %440 = vadd.xlane.f32.xlu0 %v439
        %v441 = vpop.xlane.xlu0 %440
        %v442 = vsel %vm432, %v427, 0.0
        %443 = vadd.xlane.f32.xlu0 %v442
        %v444 = vpop.xlane.xlu0 %443
        %v445 = vsel %vm432, %v428, 0.0
        %446 = vadd.xlane.f32.xlu0 %v445
        %v447 = vpop.xlane.xlu0 %446
        %v448 = vsel %vm432, %v429, 0.0
        %449 = vadd.xlane.f32.xlu0 %v448
        %v450 = vpop.xlane.xlu0 %449
        %v451 = vsel %vm432, %v430, 0.0
        %452 = vadd.xlane.f32.xlu0 %v451
        %v453 = vpop.xlane.xlu0 %452
        %v454 = vsel %vm432, %v431, 0.0
        %455 = vadd.xlane.f32.xlu0 %v454
        %v456 = vpop.xlane.xlu0 %455
        %v457 = vcvt.s32.f32 %v374
        %v458 = vsub.f32 %v435, %v457
        %v459 = vsub.f32 %v438, %v457
        %v460 = vsub.f32 %v441, %v457
        %v461 = vsub.f32 %v444, %v457
        %v462 = vsub.f32 %v447, %v457
        %v463 = vsub.f32 %v450, %v457
        %v464 = vsub.f32 %v453, %v457
        %v465 = vsub.f32 %v456, %v457
        %v466 = vand.u32 2147483647, %v458
        %v467 = vand.u32 2147483647, %v459
        %v468 = vand.u32 2147483647, %v460
        %v469 = vand.u32 2147483647, %v461
        %v470 = vand.u32 2147483647, %v462
        %v471 = vand.u32 2147483647, %v463
        %v472 = vand.u32 2147483647, %v464
        %v473 = vand.u32 2147483647, %v465
        %vm474 = vcmp.lt.f32.partialorder %v466, 0.5
        %vm475 = vcmp.lt.f32.partialorder %v467, 0.5
        %vm476 = vcmp.lt.f32.partialorder %v468, 0.5
        %vm477 = vcmp.lt.f32.partialorder %v469, 0.5
        %vm478 = vcmp.lt.f32.partialorder %v470, 0.5
        %vm479 = vcmp.lt.f32.partialorder %v471, 0.5
        %vm480 = vcmp.lt.f32.partialorder %v472, 0.5
        %vm481 = vcmp.lt.f32.partialorder %v473, 0.5
        %v482 = vsel %vm474, 1.0, 0.0
        %v483 = vsel %vm475, 1.0, 0.0
        %v484 = vsel %vm476, 1.0, 0.0
        %v485 = vsel %vm477, 1.0, 0.0
        %v486 = vsel %vm478, 1.0, 0.0
        %v487 = vsel %vm479, 1.0, 0.0
        %v488 = vsel %vm480, 1.0, 0.0
        %v489 = vsel %vm481, 1.0, 0.0
        %v490 = vmul.f32 %v482, %v313
        %v491 = vmul.f32 %v483, %v320
        %v492 = vmul.f32 %v484, %v327
        %v493 = vmul.f32 %v485, %v334
        %v494 = vmul.f32 %v486, %v341
        %v495 = vmul.f32 %v487, %v348
        %v496 = vmul.f32 %v488, %v355
        %v497 = vmul.f32 %v489, %v362
        %v498 = vsel %vm432, %v490, 0.0
        %v499 = vrot.slane %v498, 4
        %v500 = vadd.f32 %v498, %v499
        %v501 = vrot.slane %v500, 2
        %v502 = vadd.f32 %v500, %v501
        %v503 = vrot.slane %v502, 1
        %v504 = vadd.f32 %v502, %v503
        %v505 = vsel %vm432, %v491, 0.0
        %v506 = vrot.slane %v505, 4
        %v507 = vadd.f32 %v505, %v506
        %v508 = vrot.slane %v507, 2
        %v509 = vadd.f32 %v507, %v508
        %v510 = vrot.slane %v509, 1
        %v511 = vadd.f32 %v509, %v510
        %v512 = vsel %vm432, %v492, 0.0
        %v513 = vrot.slane %v512, 4
        %v514 = vadd.f32 %v512, %v513
        %v515 = vrot.slane %v514, 2
        %v516 = vadd.f32 %v514, %v515
        %v517 = vrot.slane %v516, 1
        %v518 = vadd.f32 %v516, %v517
        %v519 = vsel %vm432, %v493, 0.0
        %v520 = vrot.slane %v519, 4
        %v521 = vadd.f32 %v519, %v520
        %v522 = vrot.slane %v521, 2
        %v523 = vadd.f32 %v521, %v522
        %v524 = vrot.slane %v523, 1
        %v525 = vadd.f32 %v523, %v524
        %v526 = vsel %vm432, %v494, 0.0
        %v527 = vrot.slane %v526, 4
        %v528 = vadd.f32 %v526, %v527
        %v529 = vrot.slane %v528, 2
        %v530 = vadd.f32 %v528, %v529
        %v531 = vrot.slane %v530, 1
        %v532 = vadd.f32 %v530, %v531
        %v533 = vsel %vm432, %v495, 0.0
        %v534 = vrot.slane %v533, 4
        %v535 = vadd.f32 %v533, %v534
        %v536 = vrot.slane %v535, 2
        %v537 = vadd.f32 %v535, %v536
        %v538 = vrot.slane %v537, 1
        %v539 = vadd.f32 %v537, %v538
        %v540 = vsel %vm432, %v496, 0.0
        %v541 = vrot.slane %v540, 4
        %v542 = vadd.f32 %v540, %v541
        %v543 = vrot.slane %v542, 2
        %v544 = vadd.f32 %v542, %v543
        %v545 = vrot.slane %v544, 1
        %v546 = vadd.f32 %v544, %v545
        %v547 = vsel %vm432, %v497, 0.0
        %v548 = vrot.slane %v547, 4
        %v549 = vadd.f32 %v547, %v548
        %v550 = vrot.slane %v549, 2
        %v551 = vadd.f32 %v549, %v550
        %v552 = vrot.slane %v551, 1
        %v553 = vadd.f32 %v551, %v552
        %v554 = vlaneseq
        %v555 = vshrl.u32 %v554, 7
        %557 = vset.pattern.permute.xlu0 %v555
        %558 = vperm.xlu0 %557, %v504
        %v559 = vpop.permute.xlu0 %558
        %v560 = vlaneseq
        %v561 = vshrl.u32 %v560, 7
        %563 = vset.pattern.permute.xlu0 %v561
        %564 = vperm.xlu0 %563, %v511
        %v565 = vpop.permute.xlu0 %564
        %v566 = vlaneseq
        %v567 = vshrl.u32 %v566, 7
        %569 = vset.pattern.permute.xlu0 %v567
        %570 = vperm.xlu0 %569, %v518
        %v571 = vpop.permute.xlu0 %570
        %v572 = vlaneseq
        %v573 = vshrl.u32 %v572, 7
        %575 = vset.pattern.permute.xlu0 %v573
        %576 = vperm.xlu0 %575, %v525
        %v577 = vpop.permute.xlu0 %576
        %v578 = vlaneseq
        %v579 = vshrl.u32 %v578, 7
        %581 = vset.pattern.permute.xlu0 %v579
        %582 = vperm.xlu0 %581, %v532
        %v583 = vpop.permute.xlu0 %582
        %v584 = vlaneseq
        %v585 = vshrl.u32 %v584, 7
        %587 = vset.pattern.permute.xlu0 %v585
        %588 = vperm.xlu0 %587, %v539
        %v589 = vpop.permute.xlu0 %588
        %v590 = vlaneseq
        %v591 = vshrl.u32 %v590, 7
        %593 = vset.pattern.permute.xlu0 %v591
        %594 = vperm.xlu0 %593, %v546
        %v595 = vpop.permute.xlu0 %594
        %v596 = vlaneseq
        %v597 = vshrl.u32 %v596, 7
        %599 = vset.pattern.permute.xlu0 %v597
        %600 = vperm.xlu0 %599, %v553
        %v601 = vpop.permute.xlu0 %600
        %v602 = vsub.f32 %v375, %v559
        %v603 = vsub.f32 %v376, %v565
        %v604 = vsub.f32 %v377, %v571
        %v605 = vsub.f32 %v378, %v577
        %v606 = vsub.f32 %v379, %v583
        %v607 = vsub.f32 %v380, %v589
        %v608 = vsub.f32 %v381, %v595
        %v609 = vsub.f32 %v382, %v601
        %v610 = vmul.f32 %v602, %v602
        %v611 = vmul.f32 %v603, %v603
        %v612 = vmul.f32 %v604, %v604
        %v613 = vmul.f32 %v605, %v605
        %v614 = vmul.f32 %v606, %v606
        %v615 = vmul.f32 %v607, %v607
        %v616 = vmul.f32 %v608, %v608
        %v617 = vmul.f32 %v609, %v609
        %v618 = vsub.f32 0.0, %v610
        %v619 = vsub.f32 0.0, %v611
        %v620 = vsub.f32 0.0, %v612
        %v621 = vsub.f32 0.0, %v613
        %v622 = vsub.f32 0.0, %v614
        %v623 = vsub.f32 0.0, %v615
        %v624 = vsub.f32 0.0, %v616
        %v625 = vsub.f32 0.0, %v617
        %v626 = vrcp.pop 0.008
        %v627 = vmul.f32 0.008, %v626
        %v628 = vsub.f32 1.0, %v627
        %v629 = vmul.f32 %v626, %v628
        %v630 = vadd.f32 %v626, %v629
        %vm631 = vweird.f32 %v626
        %v632 = vsel %vm631, %v626, %v630
        %v633 = vmul.f32 %v618, %v632
        %v634 = vmul.f32 %v619, %v632
        %v635 = vmul.f32 %v620, %v632
        %v636 = vmul.f32 %v621, %v632
        %v637 = vmul.f32 %v622, %v632
        %v638 = vmul.f32 %v623, %v632
        %v639 = vmul.f32 %v624, %v632
        %v640 = vmul.f32 %v625, %v632
        %v641 = vmul.f32 %v633, 1.442695
        %v642 = vpow.pop %v641
        %v643 = vmul.f32 %v634, 1.442695
        %v644 = vpow.pop %v643
        %v645 = vmul.f32 %v635, 1.442695
        %v646 = vpow.pop %v645
        %v647 = vmul.f32 %v636, 1.442695
        %v648 = vpow.pop %v647
        %v649 = vmul.f32 %v637, 1.442695
        %v650 = vpow.pop %v649
        %v651 = vmul.f32 %v638, 1.442695
        %v652 = vpow.pop %v651
        %v653 = vmul.f32 %v639, 1.442695
        %v654 = vpow.pop %v653
        %v655 = vmul.f32 %v640, 1.442695
        %v656 = vpow.pop %v655
        %v657 = vsel %vm432, %v642, 0.0
        %658 = vadd.xlane.f32.xlu0 %v657
        %v659 = vpop.xlane.xlu0 %658
        %v660 = vsel %vm432, %v644, 0.0
        %661 = vadd.xlane.f32.xlu0 %v660
        %v662 = vpop.xlane.xlu0 %661
        %v663 = vsel %vm432, %v646, 0.0
        %664 = vadd.xlane.f32.xlu0 %v663
        %v665 = vpop.xlane.xlu0 %664
        %v666 = vsel %vm432, %v648, 0.0
        %667 = vadd.xlane.f32.xlu0 %v666
        %v668 = vpop.xlane.xlu0 %667
        %v669 = vsel %vm432, %v650, 0.0
        %670 = vadd.xlane.f32.xlu0 %v669
        %v671 = vpop.xlane.xlu0 %670
        %v672 = vsel %vm432, %v652, 0.0
        %673 = vadd.xlane.f32.xlu0 %v672
        %v674 = vpop.xlane.xlu0 %673
        %v675 = vsel %vm432, %v654, 0.0
        %676 = vadd.xlane.f32.xlu0 %v675
        %v677 = vpop.xlane.xlu0 %676
        %v678 = vsel %vm432, %v656, 0.0
        %679 = vadd.xlane.f32.xlu0 %v678
        %v680 = vpop.xlane.xlu0 %679
        %v681 = vrcp.pop %v659
        %v682 = vmul.f32 %v659, %v681
        %v683 = vsub.f32 1.0, %v682
        %v684 = vmul.f32 %v681, %v683
        %v685 = vadd.f32 %v681, %v684
        %vm686 = vweird.f32 %v659
        %vm687 = vweird.f32 %v681
        %vm688 = vmor %vm686, %vm687
        %v689 = vsel %vm688, %v681, %v685
        %v690 = vand.u32 2147483647, %v659
        %vm691 = vcmp.eq.f32.partialorder %v690, 8.507059e+37
        %v692 = vand.u32 %v659, 2147483648
        %v693 = vor.u32 1.1754944e-38, %v692
        %v694 = vsel %vm691, %v693, %v689
        %v695 = vmul.f32 1.0, %v694
        %v696 = vrcp.pop %v662
        %v697 = vmul.f32 %v662, %v696
        %v698 = vsub.f32 1.0, %v697
        %v699 = vmul.f32 %v696, %v698
        %v700 = vadd.f32 %v696, %v699
        %vm701 = vweird.f32 %v662
        %vm702 = vweird.f32 %v696
        %vm703 = vmor %vm701, %vm702
        %v704 = vsel %vm703, %v696, %v700
        %v705 = vand.u32 2147483647, %v662
        %vm706 = vcmp.eq.f32.partialorder %v705, 8.507059e+37
        %v707 = vand.u32 %v662, 2147483648
        %v708 = vor.u32 1.1754944e-38, %v707
        %v709 = vsel %vm706, %v708, %v704
        %v710 = vmul.f32 1.0, %v709
        %v711 = vrcp.pop %v665
        %v712 = vmul.f32 %v665, %v711
        %v713 = vsub.f32 1.0, %v712
        %v714 = vmul.f32 %v711, %v713
        %v715 = vadd.f32 %v711, %v714
        %vm716 = vweird.f32 %v665
        %vm717 = vweird.f32 %v711
        %vm718 = vmor %vm716, %vm717
        %v719 = vsel %vm718, %v711, %v715
        %v720 = vand.u32 2147483647, %v665
        %vm721 = vcmp.eq.f32.partialorder %v720, 8.507059e+37
        %v722 = vand.u32 %v665, 2147483648
        %v723 = vor.u32 1.1754944e-38, %v722
        %v724 = vsel %vm721, %v723, %v719
        %v725 = vmul.f32 1.0, %v724
        %v726 = vrcp.pop %v668
        %v727 = vmul.f32 %v668, %v726
        %v728 = vsub.f32 1.0, %v727
        %v729 = vmul.f32 %v726, %v728
        %v730 = vadd.f32 %v726, %v729
        %vm731 = vweird.f32 %v668
        %vm732 = vweird.f32 %v726
        %vm733 = vmor %vm731, %vm732
        %v734 = vsel %vm733, %v726, %v730
        %v735 = vand.u32 2147483647, %v668
        %vm736 = vcmp.eq.f32.partialorder %v735, 8.507059e+37
        %v737 = vand.u32 %v668, 2147483648
        %v738 = vor.u32 1.1754944e-38, %v737
        %v739 = vsel %vm736, %v738, %v734
        %v740 = vmul.f32 1.0, %v739
        %v741 = vrcp.pop %v671
        %v742 = vmul.f32 %v671, %v741
        %v743 = vsub.f32 1.0, %v742
        %v744 = vmul.f32 %v741, %v743
        %v745 = vadd.f32 %v741, %v744
        %vm746 = vweird.f32 %v671
        %vm747 = vweird.f32 %v741
        %vm748 = vmor %vm746, %vm747
        %v749 = vsel %vm748, %v741, %v745
        %v750 = vand.u32 2147483647, %v671
        %vm751 = vcmp.eq.f32.partialorder %v750, 8.507059e+37
        %v752 = vand.u32 %v671, 2147483648
        %v753 = vor.u32 1.1754944e-38, %v752
        %v754 = vsel %vm751, %v753, %v749
        %v755 = vmul.f32 1.0, %v754
        %v756 = vrcp.pop %v674
        %v757 = vmul.f32 %v674, %v756
        %v758 = vsub.f32 1.0, %v757
        %v759 = vmul.f32 %v756, %v758
        %v760 = vadd.f32 %v756, %v759
        %vm761 = vweird.f32 %v674
        %vm762 = vweird.f32 %v756
        %vm763 = vmor %vm761, %vm762
        %v764 = vsel %vm763, %v756, %v760
        %v765 = vand.u32 2147483647, %v674
        %vm766 = vcmp.eq.f32.partialorder %v765, 8.507059e+37
        %v767 = vand.u32 %v674, 2147483648
        %v768 = vor.u32 1.1754944e-38, %v767
        %v769 = vsel %vm766, %v768, %v764
        %v770 = vmul.f32 1.0, %v769
        %v771 = vrcp.pop %v677
        %v772 = vmul.f32 %v677, %v771
        %v773 = vsub.f32 1.0, %v772
        %v774 = vmul.f32 %v771, %v773
        %v775 = vadd.f32 %v771, %v774
        %vm776 = vweird.f32 %v677
        %vm777 = vweird.f32 %v771
        %vm778 = vmor %vm776, %vm777
        %v779 = vsel %vm778, %v771, %v775
        %v780 = vand.u32 2147483647, %v677
        %vm781 = vcmp.eq.f32.partialorder %v780, 8.507059e+37
        %v782 = vand.u32 %v677, 2147483648
        %v783 = vor.u32 1.1754944e-38, %v782
        %v784 = vsel %vm781, %v783, %v779
        %v785 = vmul.f32 1.0, %v784
        %v786 = vrcp.pop %v680
        %v787 = vmul.f32 %v680, %v786
        %v788 = vsub.f32 1.0, %v787
        %v789 = vmul.f32 %v786, %v788
        %v790 = vadd.f32 %v786, %v789
        %vm791 = vweird.f32 %v680
        %vm792 = vweird.f32 %v786
        %vm793 = vmor %vm791, %vm792
        %v794 = vsel %vm793, %v786, %v790
        %v795 = vand.u32 2147483647, %v680
        %vm796 = vcmp.eq.f32.partialorder %v795, 8.507059e+37
        %v797 = vand.u32 %v680, 2147483648
        %v798 = vor.u32 1.1754944e-38, %v797
        %v799 = vsel %vm796, %v798, %v794
        %v800 = vmul.f32 1.0, %v799
        %v801 = vmul.f32 %v642, %v695
        %v802 = vmul.f32 %v644, %v710
        %v803 = vmul.f32 %v646, %v725
        %v804 = vmul.f32 %v648, %v740
        %v805 = vmul.f32 %v650, %v755
        %v806 = vmul.f32 %v652, %v770
        %v807 = vmul.f32 %v654, %v785
        %v808 = vmul.f32 %v656, %v800
        %v809 = vperm.slane %v305, 0
        %v810 = vlaneseq
        %v811 = vshrl.u32 %v810, 7
        %813 = vset.pattern.permute.xlu0 %v811
        %814 = vperm.xlu0 %813, %v809
        %v815 = vpop.permute.xlu0 %814
        %v816 = vperm.slane %v305, 1
        %v817 = vlaneseq
        %v818 = vshrl.u32 %v817, 7
        %820 = vset.pattern.permute.xlu0 %v818
        %821 = vperm.xlu0 %820, %v816
        %v822 = vpop.permute.xlu0 %821
        %v823 = vperm.slane %v305, 2
        %v824 = vlaneseq
        %v825 = vshrl.u32 %v824, 7
        %827 = vset.pattern.permute.xlu0 %v825
        %828 = vperm.xlu0 %827, %v823
        %v829 = vpop.permute.xlu0 %828
        %v830 = vperm.slane %v305, 3
        %v831 = vlaneseq
        %v832 = vshrl.u32 %v831, 7
        %834 = vset.pattern.permute.xlu0 %v832
        %835 = vperm.xlu0 %834, %v830
        %v836 = vpop.permute.xlu0 %835
        %v837 = vperm.slane %v305, 4
        %v838 = vlaneseq
        %v839 = vshrl.u32 %v838, 7
        %841 = vset.pattern.permute.xlu0 %v839
        %842 = vperm.xlu0 %841, %v837
        %v843 = vpop.permute.xlu0 %842
        %v844 = vperm.slane %v305, 5
        %v845 = vlaneseq
        %v846 = vshrl.u32 %v845, 7
        %848 = vset.pattern.permute.xlu0 %v846
        %849 = vperm.xlu0 %848, %v844
        %v850 = vpop.permute.xlu0 %849
        %v851 = vperm.slane %v305, 6
        %v852 = vlaneseq
        %v853 = vshrl.u32 %v852, 7
        %855 = vset.pattern.permute.xlu0 %v853
        %856 = vperm.xlu0 %855, %v851
        %v857 = vpop.permute.xlu0 %856
        %v858 = vperm.slane %v305, 7
        %v859 = vlaneseq
        %v860 = vshrl.u32 %v859, 7
        %862 = vset.pattern.permute.xlu0 %v860
        %863 = vperm.xlu0 %862, %v858
        %v864 = vpop.permute.xlu0 %863
        %v866 = vrot.slane %v305, 1
        %v867 = vrot.slane %v305, 2
        %v868 = vrot.slane %v305, 3
        %v869 = vrot.slane %v305, 4
        %v870 = vrot.slane %v305, 5
        %v871 = vrot.slane %v305, 6
        %v872 = vrot.slane %v305, 7
        %v873 = vperm.slane %v305, 0
        %v874 = vperm.slane %v866, 0
        %v875 = vperm.slane %v867, 0
        %v876 = vperm.slane %v868, 0
        %v877 = vperm.slane %v869, 0
        %v878 = vperm.slane %v870, 0
        %v879 = vperm.slane %v871, 0
        %v880 = vperm.slane %v872, 0
        %vm889 = vcmp.gt.f32.partialorder %v873, %v815
        %vm890 = vcmp.gt.f32.partialorder %v874, %v822
        %vm891 = vcmp.gt.f32.partialorder %v875, %v829
        %vm892 = vcmp.gt.f32.partialorder %v876, %v836
        %vm893 = vcmp.gt.f32.partialorder %v877, %v843
        %vm894 = vcmp.gt.f32.partialorder %v878, %v850
        %vm895 = vcmp.gt.f32.partialorder %v879, %v857
        %vm896 = vcmp.gt.f32.partialorder %v880, %v864
        %vm897 = vcmp.eq.f32.partialorder %v873, %v815
        %vm898 = vcmp.eq.f32.partialorder %v874, %v822
        %vm899 = vcmp.eq.f32.partialorder %v875, %v829
        %vm900 = vcmp.eq.f32.partialorder %v876, %v836
        %vm901 = vcmp.eq.f32.partialorder %v877, %v843
        %vm902 = vcmp.eq.f32.partialorder %v878, %v850
        %vm903 = vcmp.eq.f32.partialorder %v879, %v857
        %vm904 = vcmp.eq.f32.partialorder %v880, %v864
        %vm905 = vmand %vm897, %vm407
        %vm906 = vmand %vm898, %vm407
        %vm907 = vmand %vm899, %vm407
        %vm908 = vmand %vm900, %vm407
        %vm909 = vmand %vm901, %vm407
        %vm910 = vmand %vm902, %vm407
        %vm911 = vmand %vm903, %vm407
        %vm912 = vmand %vm904, %vm407
        %vm913 = vmor %vm889, %vm905
        %vm914 = vmor %vm890, %vm906
        %vm915 = vmor %vm891, %vm907
        %vm916 = vmor %vm892, %vm908
        %vm917 = vmor %vm893, %vm909
        %vm918 = vmor %vm894, %vm910
        %vm919 = vmor %vm895, %vm911
        %vm920 = vmor %vm896, %vm912
        %v921 = vsel %vm913, 1.0, 0.0
        %v922 = vsel %vm914, 1.0, 0.0
        %v923 = vsel %vm915, 1.0, 0.0
        %v924 = vsel %vm916, 1.0, 0.0
        %v925 = vsel %vm917, 1.0, 0.0
        %v926 = vsel %vm918, 1.0, 0.0
        %v927 = vsel %vm919, 1.0, 0.0
        %v928 = vsel %vm920, 1.0, 0.0
        %v929 = vsel %vm432, %v921, 0.0
        %930 = vadd.xlane.f32.xlu0 %v929
        %v931 = vpop.xlane.xlu0 %930
        %v932 = vsel %vm432, %v922, 0.0
        %933 = vadd.xlane.f32.xlu0 %v932
        %v934 = vpop.xlane.xlu0 %933
        %v935 = vsel %vm432, %v923, 0.0
        %936 = vadd.xlane.f32.xlu0 %v935
        %v937 = vpop.xlane.xlu0 %936
        %v938 = vsel %vm432, %v924, 0.0
        %939 = vadd.xlane.f32.xlu0 %v938
        %v940 = vpop.xlane.xlu0 %939
        %v941 = vsel %vm432, %v925, 0.0
        %942 = vadd.xlane.f32.xlu0 %v941
        %v943 = vpop.xlane.xlu0 %942
        %v944 = vsel %vm432, %v926, 0.0
        %945 = vadd.xlane.f32.xlu0 %v944
        %v946 = vpop.xlane.xlu0 %945
        %v947 = vsel %vm432, %v927, 0.0
        %948 = vadd.xlane.f32.xlu0 %v947
        %v949 = vpop.xlane.xlu0 %948
        %v950 = vsel %vm432, %v928, 0.0
        %951 = vadd.xlane.f32.xlu0 %v950
        %v952 = vpop.xlane.xlu0 %951
        %v953 = vsub.f32 %v931, %v457
        %v954 = vsub.f32 %v934, %v457
        %v955 = vsub.f32 %v937, %v457
        %v956 = vsub.f32 %v940, %v457
        %v957 = vsub.f32 %v943, %v457
        %v958 = vsub.f32 %v946, %v457
        %v959 = vsub.f32 %v949, %v457
        %v960 = vsub.f32 %v952, %v457
        %v961 = vand.u32 2147483647, %v953
        %v962 = vand.u32 2147483647, %v954
        %v963 = vand.u32 2147483647, %v955
        %v964 = vand.u32 2147483647, %v956
        %v965 = vand.u32 2147483647, %v957
        %v966 = vand.u32 2147483647, %v958
        %v967 = vand.u32 2147483647, %v959
        %v968 = vand.u32 2147483647, %v960
        %vm969 = vcmp.lt.f32.partialorder %v961, 0.5
        %vm970 = vcmp.lt.f32.partialorder %v962, 0.5
        %vm971 = vcmp.lt.f32.partialorder %v963, 0.5
        %vm972 = vcmp.lt.f32.partialorder %v964, 0.5
        %vm973 = vcmp.lt.f32.partialorder %v965, 0.5
        %vm974 = vcmp.lt.f32.partialorder %v966, 0.5
        %vm975 = vcmp.lt.f32.partialorder %v967, 0.5
        %vm976 = vcmp.lt.f32.partialorder %v968, 0.5
        %v977 = vsel %vm969, 1.0, 0.0
        %v978 = vsel %vm970, 1.0, 0.0
        %v979 = vsel %vm971, 1.0, 0.0
        %v980 = vsel %vm972, 1.0, 0.0
        %v981 = vsel %vm973, 1.0, 0.0
        %v982 = vsel %vm974, 1.0, 0.0
        %v983 = vsel %vm975, 1.0, 0.0
        %v984 = vsel %vm976, 1.0, 0.0
        %v985 = vmul.f32 %v977, %v815
        %v986 = vmul.f32 %v978, %v822
        %v987 = vmul.f32 %v979, %v829
        %v988 = vmul.f32 %v980, %v836
        %v989 = vmul.f32 %v981, %v843
        %v990 = vmul.f32 %v982, %v850
        %v991 = vmul.f32 %v983, %v857
        %v992 = vmul.f32 %v984, %v864
        %v993 = vsel %vm432, %v985, 0.0
        %v994 = vrot.slane %v993, 4
        %v995 = vadd.f32 %v993, %v994
        %v996 = vrot.slane %v995, 2
        %v997 = vadd.f32 %v995, %v996
        %v998 = vrot.slane %v997, 1
        %v999 = vadd.f32 %v997, %v998
        %v1000 = vsel %vm432, %v986, 0.0
        %v1001 = vrot.slane %v1000, 4
        %v1002 = vadd.f32 %v1000, %v1001
        %v1003 = vrot.slane %v1002, 2
        %v1004 = vadd.f32 %v1002, %v1003
        %v1005 = vrot.slane %v1004, 1
        %v1006 = vadd.f32 %v1004, %v1005
        %v1007 = vsel %vm432, %v987, 0.0
        %v1008 = vrot.slane %v1007, 4
        %v1009 = vadd.f32 %v1007, %v1008
        %v1010 = vrot.slane %v1009, 2
        %v1011 = vadd.f32 %v1009, %v1010
        %v1012 = vrot.slane %v1011, 1
        %v1013 = vadd.f32 %v1011, %v1012
        %v1014 = vsel %vm432, %v988, 0.0
        %v1015 = vrot.slane %v1014, 4
        %v1016 = vadd.f32 %v1014, %v1015
        %v1017 = vrot.slane %v1016, 2
        %v1018 = vadd.f32 %v1016, %v1017
        %v1019 = vrot.slane %v1018, 1
        %v1020 = vadd.f32 %v1018, %v1019
        %v1021 = vsel %vm432, %v989, 0.0
        %v1022 = vrot.slane %v1021, 4
        %v1023 = vadd.f32 %v1021, %v1022
        %v1024 = vrot.slane %v1023, 2
        %v1025 = vadd.f32 %v1023, %v1024
        %v1026 = vrot.slane %v1025, 1
        %v1027 = vadd.f32 %v1025, %v1026
        %v1028 = vsel %vm432, %v990, 0.0
        %v1029 = vrot.slane %v1028, 4
        %v1030 = vadd.f32 %v1028, %v1029
        %v1031 = vrot.slane %v1030, 2
        %v1032 = vadd.f32 %v1030, %v1031
        %v1033 = vrot.slane %v1032, 1
        %v1034 = vadd.f32 %v1032, %v1033
        %v1035 = vsel %vm432, %v991, 0.0
        %v1036 = vrot.slane %v1035, 4
        %v1037 = vadd.f32 %v1035, %v1036
        %v1038 = vrot.slane %v1037, 2
        %v1039 = vadd.f32 %v1037, %v1038
        %v1040 = vrot.slane %v1039, 1
        %v1041 = vadd.f32 %v1039, %v1040
        %v1042 = vsel %vm432, %v992, 0.0
        %v1043 = vrot.slane %v1042, 4
        %v1044 = vadd.f32 %v1042, %v1043
        %v1045 = vrot.slane %v1044, 2
        %v1046 = vadd.f32 %v1044, %v1045
        %v1047 = vrot.slane %v1046, 1
        %v1048 = vadd.f32 %v1046, %v1047
        %v1049 = vlaneseq
        %v1050 = vshrl.u32 %v1049, 7
        %1052 = vset.pattern.permute.xlu0 %v1050
        %1053 = vperm.xlu0 %1052, %v999
        %v1054 = vpop.permute.xlu0 %1053
        %v1055 = vlaneseq
        %v1056 = vshrl.u32 %v1055, 7
        %1058 = vset.pattern.permute.xlu0 %v1056
        %1059 = vperm.xlu0 %1058, %v1006
        %v1060 = vpop.permute.xlu0 %1059
        %v1061 = vlaneseq
        %v1062 = vshrl.u32 %v1061, 7
        %1064 = vset.pattern.permute.xlu0 %v1062
        %1065 = vperm.xlu0 %1064, %v1013
        %v1066 = vpop.permute.xlu0 %1065
        %v1067 = vlaneseq
        %v1068 = vshrl.u32 %v1067, 7
        %1070 = vset.pattern.permute.xlu0 %v1068
        %1071 = vperm.xlu0 %1070, %v1020
        %v1072 = vpop.permute.xlu0 %1071
        %v1073 = vlaneseq
        %v1074 = vshrl.u32 %v1073, 7
        %1076 = vset.pattern.permute.xlu0 %v1074
        %1077 = vperm.xlu0 %1076, %v1027
        %v1078 = vpop.permute.xlu0 %1077
        %v1079 = vlaneseq
        %v1080 = vshrl.u32 %v1079, 7
        %1082 = vset.pattern.permute.xlu0 %v1080
        %1083 = vperm.xlu0 %1082, %v1034
        %v1084 = vpop.permute.xlu0 %1083
        %v1085 = vlaneseq
        %v1086 = vshrl.u32 %v1085, 7
        %1088 = vset.pattern.permute.xlu0 %v1086
        %1089 = vperm.xlu0 %1088, %v1041
        %v1090 = vpop.permute.xlu0 %1089
        %v1091 = vlaneseq
        %v1092 = vshrl.u32 %v1091, 7
        %1094 = vset.pattern.permute.xlu0 %v1092
        %1095 = vperm.xlu0 %1094, %v1048
        %v1096 = vpop.permute.xlu0 %1095
        %v1097 = vsub.f32 %v873, %v1054
        %v1098 = vsub.f32 %v874, %v1060
        %v1099 = vsub.f32 %v875, %v1066
        %v1100 = vsub.f32 %v876, %v1072
        %v1101 = vsub.f32 %v877, %v1078
        %v1102 = vsub.f32 %v878, %v1084
        %v1103 = vsub.f32 %v879, %v1090
        %v1104 = vsub.f32 %v880, %v1096
        %v1105 = vmul.f32 %v1097, %v1097
        %v1106 = vmul.f32 %v1098, %v1098
        %v1107 = vmul.f32 %v1099, %v1099
        %v1108 = vmul.f32 %v1100, %v1100
        %v1109 = vmul.f32 %v1101, %v1101
        %v1110 = vmul.f32 %v1102, %v1102
        %v1111 = vmul.f32 %v1103, %v1103
        %v1112 = vmul.f32 %v1104, %v1104
        %v1113 = vsub.f32 0.0, %v1105
        %v1114 = vsub.f32 0.0, %v1106
        %v1115 = vsub.f32 0.0, %v1107
        %v1116 = vsub.f32 0.0, %v1108
        %v1117 = vsub.f32 0.0, %v1109
        %v1118 = vsub.f32 0.0, %v1110
        %v1119 = vsub.f32 0.0, %v1111
        %v1120 = vsub.f32 0.0, %v1112
        %v1121 = vmul.f32 %v1113, %v632
        %v1122 = vmul.f32 %v1114, %v632
        %v1123 = vmul.f32 %v1115, %v632
        %v1124 = vmul.f32 %v1116, %v632
        %v1125 = vmul.f32 %v1117, %v632
        %v1126 = vmul.f32 %v1118, %v632
        %v1127 = vmul.f32 %v1119, %v632
        %v1128 = vmul.f32 %v1120, %v632
        %v1129 = vmul.f32 %v1121, 1.442695
        %v1130 = vpow.pop %v1129
        %v1131 = vmul.f32 %v1122, 1.442695
        %v1132 = vpow.pop %v1131
        %v1133 = vmul.f32 %v1123, 1.442695
        %v1134 = vpow.pop %v1133
        %v1135 = vmul.f32 %v1124, 1.442695
        %v1136 = vpow.pop %v1135
        %v1137 = vmul.f32 %v1125, 1.442695
        %v1138 = vpow.pop %v1137
        %v1139 = vmul.f32 %v1126, 1.442695
        %v1140 = vpow.pop %v1139
        %v1141 = vmul.f32 %v1127, 1.442695
        %v1142 = vpow.pop %v1141
        %v1143 = vmul.f32 %v1128, 1.442695
        %v1144 = vpow.pop %v1143
        %v1145 = vsel %vm432, %v1130, 0.0
        %1146 = vadd.xlane.f32.xlu0 %v1145
        %v1147 = vpop.xlane.xlu0 %1146
        %v1148 = vsel %vm432, %v1132, 0.0
        %1149 = vadd.xlane.f32.xlu0 %v1148
        %v1150 = vpop.xlane.xlu0 %1149
        %v1151 = vsel %vm432, %v1134, 0.0
        %1152 = vadd.xlane.f32.xlu0 %v1151
        %v1153 = vpop.xlane.xlu0 %1152
        %v1154 = vsel %vm432, %v1136, 0.0
        %1155 = vadd.xlane.f32.xlu0 %v1154
        %v1156 = vpop.xlane.xlu0 %1155
        %v1157 = vsel %vm432, %v1138, 0.0
        %1158 = vadd.xlane.f32.xlu0 %v1157
        %v1159 = vpop.xlane.xlu0 %1158
        %v1160 = vsel %vm432, %v1140, 0.0
        %1161 = vadd.xlane.f32.xlu0 %v1160
        %v1162 = vpop.xlane.xlu0 %1161
        %v1163 = vsel %vm432, %v1142, 0.0
        %1164 = vadd.xlane.f32.xlu0 %v1163
        %v1165 = vpop.xlane.xlu0 %1164
        %v1166 = vsel %vm432, %v1144, 0.0
        %1167 = vadd.xlane.f32.xlu0 %v1166
        %v1168 = vpop.xlane.xlu0 %1167
        %v1169 = vrcp.pop %v1147
        %v1170 = vmul.f32 %v1147, %v1169
        %v1171 = vsub.f32 1.0, %v1170
        %v1172 = vmul.f32 %v1169, %v1171
        %v1173 = vadd.f32 %v1169, %v1172
        %vm1174 = vweird.f32 %v1147
        %vm1175 = vweird.f32 %v1169
        %vm1176 = vmor %vm1174, %vm1175
        %v1177 = vsel %vm1176, %v1169, %v1173
        %v1178 = vand.u32 2147483647, %v1147
        %vm1179 = vcmp.eq.f32.partialorder %v1178, 8.507059e+37
        %v1180 = vand.u32 %v1147, 2147483648
        %v1181 = vor.u32 1.1754944e-38, %v1180
        %v1182 = vsel %vm1179, %v1181, %v1177
        %v1183 = vmul.f32 1.0, %v1182
        %v1184 = vrcp.pop %v1150
        %v1185 = vmul.f32 %v1150, %v1184
        %v1186 = vsub.f32 1.0, %v1185
        %v1187 = vmul.f32 %v1184, %v1186
        %v1188 = vadd.f32 %v1184, %v1187
        %vm1189 = vweird.f32 %v1150
        %vm1190 = vweird.f32 %v1184
        %vm1191 = vmor %vm1189, %vm1190
        %v1192 = vsel %vm1191, %v1184, %v1188
        %v1193 = vand.u32 2147483647, %v1150
        %vm1194 = vcmp.eq.f32.partialorder %v1193, 8.507059e+37
        %v1195 = vand.u32 %v1150, 2147483648
        %v1196 = vor.u32 1.1754944e-38, %v1195
        %v1197 = vsel %vm1194, %v1196, %v1192
        %v1198 = vmul.f32 1.0, %v1197
        %v1199 = vrcp.pop %v1153
        %v1200 = vmul.f32 %v1153, %v1199
        %v1201 = vsub.f32 1.0, %v1200
        %v1202 = vmul.f32 %v1199, %v1201
        %v1203 = vadd.f32 %v1199, %v1202
        %vm1204 = vweird.f32 %v1153
        %vm1205 = vweird.f32 %v1199
        %vm1206 = vmor %vm1204, %vm1205
        %v1207 = vsel %vm1206, %v1199, %v1203
        %v1208 = vand.u32 2147483647, %v1153
        %vm1209 = vcmp.eq.f32.partialorder %v1208, 8.507059e+37
        %v1210 = vand.u32 %v1153, 2147483648
        %v1211 = vor.u32 1.1754944e-38, %v1210
        %v1212 = vsel %vm1209, %v1211, %v1207
        %v1213 = vmul.f32 1.0, %v1212
        %v1214 = vrcp.pop %v1156
        %v1215 = vmul.f32 %v1156, %v1214
        %v1216 = vsub.f32 1.0, %v1215
        %v1217 = vmul.f32 %v1214, %v1216
        %v1218 = vadd.f32 %v1214, %v1217
        %vm1219 = vweird.f32 %v1156
        %vm1220 = vweird.f32 %v1214
        %vm1221 = vmor %vm1219, %vm1220
        %v1222 = vsel %vm1221, %v1214, %v1218
        %v1223 = vand.u32 2147483647, %v1156
        %vm1224 = vcmp.eq.f32.partialorder %v1223, 8.507059e+37
        %v1225 = vand.u32 %v1156, 2147483648
        %v1226 = vor.u32 1.1754944e-38, %v1225
        %v1227 = vsel %vm1224, %v1226, %v1222
        %v1228 = vmul.f32 1.0, %v1227
        %v1229 = vrcp.pop %v1159
        %v1230 = vmul.f32 %v1159, %v1229
        %v1231 = vsub.f32 1.0, %v1230
        %v1232 = vmul.f32 %v1229, %v1231
        %v1233 = vadd.f32 %v1229, %v1232
        %vm1234 = vweird.f32 %v1159
        %vm1235 = vweird.f32 %v1229
        %vm1236 = vmor %vm1234, %vm1235
        %v1237 = vsel %vm1236, %v1229, %v1233
        %v1238 = vand.u32 2147483647, %v1159
        %vm1239 = vcmp.eq.f32.partialorder %v1238, 8.507059e+37
        %v1240 = vand.u32 %v1159, 2147483648
        %v1241 = vor.u32 1.1754944e-38, %v1240
        %v1242 = vsel %vm1239, %v1241, %v1237
        %v1243 = vmul.f32 1.0, %v1242
        %v1244 = vrcp.pop %v1162
        %v1245 = vmul.f32 %v1162, %v1244
        %v1246 = vsub.f32 1.0, %v1245
        %v1247 = vmul.f32 %v1244, %v1246
        %v1248 = vadd.f32 %v1244, %v1247
        %vm1249 = vweird.f32 %v1162
        %vm1250 = vweird.f32 %v1244
        %vm1251 = vmor %vm1249, %vm1250
        %v1252 = vsel %vm1251, %v1244, %v1248
        %v1253 = vand.u32 2147483647, %v1162
        %vm1254 = vcmp.eq.f32.partialorder %v1253, 8.507059e+37
        %v1255 = vand.u32 %v1162, 2147483648
        %v1256 = vor.u32 1.1754944e-38, %v1255
        %v1257 = vsel %vm1254, %v1256, %v1252
        %v1258 = vmul.f32 1.0, %v1257
        %v1259 = vrcp.pop %v1165
        %v1260 = vmul.f32 %v1165, %v1259
        %v1261 = vsub.f32 1.0, %v1260
        %v1262 = vmul.f32 %v1259, %v1261
        %v1263 = vadd.f32 %v1259, %v1262
        %vm1264 = vweird.f32 %v1165
        %vm1265 = vweird.f32 %v1259
        %vm1266 = vmor %vm1264, %vm1265
        %v1267 = vsel %vm1266, %v1259, %v1263
        %v1268 = vand.u32 2147483647, %v1165
        %vm1269 = vcmp.eq.f32.partialorder %v1268, 8.507059e+37
        %v1270 = vand.u32 %v1165, 2147483648
        %v1271 = vor.u32 1.1754944e-38, %v1270
        %v1272 = vsel %vm1269, %v1271, %v1267
        %v1273 = vmul.f32 1.0, %v1272
        %v1274 = vrcp.pop %v1168
        %v1275 = vmul.f32 %v1168, %v1274
        %v1276 = vsub.f32 1.0, %v1275
        %v1277 = vmul.f32 %v1274, %v1276
        %v1278 = vadd.f32 %v1274, %v1277
        %vm1279 = vweird.f32 %v1168
        %vm1280 = vweird.f32 %v1274
        %vm1281 = vmor %vm1279, %vm1280
        %v1282 = vsel %vm1281, %v1274, %v1278
        %v1283 = vand.u32 2147483647, %v1168
        %vm1284 = vcmp.eq.f32.partialorder %v1283, 8.507059e+37
        %v1285 = vand.u32 %v1168, 2147483648
        %v1286 = vor.u32 1.1754944e-38, %v1285
        %v1287 = vsel %vm1284, %v1286, %v1282
        %v1288 = vmul.f32 1.0, %v1287
        %v1289 = vmul.f32 %v1130, %v1183
        %v1290 = vmul.f32 %v1132, %v1198
        %v1291 = vmul.f32 %v1134, %v1213
        %v1292 = vmul.f32 %v1136, %v1228
        %v1293 = vmul.f32 %v1138, %v1243
        %v1294 = vmul.f32 %v1140, %v1258
        %v1295 = vmul.f32 %v1142, %v1273
        %v1296 = vmul.f32 %v1144, %v1288
        %v1297 = vmul.f32 %v304, %v304
        %1298 = vxpose.xlu0.b32.start [1/16] %v1297, 128
        %1299 = vxpose.xlu0.b32.cont [2/16] 0.0, 128
        %1300 = vxpose.xlu0.b32.cont [3/16] 0.0, 128
        %1301 = vxpose.xlu0.b32.cont [4/16] 0.0, 128
        %1302 = vxpose.xlu0.b32.cont [5/16] 0.0, 128
        %1303 = vxpose.xlu0.b32.cont [6/16] 0.0, 128
        %1304 = vxpose.xlu0.b32.cont [7/16] 0.0, 128
        %1305 = vxpose.xlu0.b32.cont [8/16] 0.0, 128
        %1306 = vxpose.xlu0.b32.cont [9/16] 0.0, 128
        %1307 = vxpose.xlu0.b32.cont [10/16] 0.0, 128
        %1308 = vxpose.xlu0.b32.cont [11/16] 0.0, 128
        %1309 = vxpose.xlu0.b32.cont [12/16] 0.0, 128
        %1310 = vxpose.xlu0.b32.cont [13/16] 0.0, 128
        %1311 = vxpose.xlu0.b32.cont [14/16] 0.0, 128
        %1312 = vxpose.xlu0.b32.cont [15/16] 0.0, 128
        %1313 = vxpose.xlu0.b32.end [16/16] 0.0, 128
        %v1314 = vpop.trf.xlu0
        %v1315 = vpop.trf.xlu0
        %v1316 = vpop.trf.xlu0
        %v1317 = vpop.trf.xlu0
        %v1318 = vpop.trf.xlu0
        %v1319 = vpop.trf.xlu0
        %v1320 = vpop.trf.xlu0
        %v1321 = vpop.trf.xlu0
        %v1322 = vpop.trf.xlu0
        %v1323 = vpop.trf.xlu0
        %v1324 = vpop.trf.xlu0
        %v1325 = vpop.trf.xlu0
        %v1326 = vpop.trf.xlu0
        %v1327 = vpop.trf.xlu0
        %v1328 = vpop.trf.xlu0
        %v1329 = vpop.trf.xlu0
        %v1331 = vsel %vm432, %v1314, 0
        %1333 = vmatpush.msra.mxu0 0.0
        %1334 = vmatpush.msra.mxu0 0.0
        %1335 = vmatpush.msra.mxu0 0.0
        %1336 = vmatpush.msra.mxu0 0.0
        %1337 = vmatpush.msra.mxu0 0.0
        %1338 = vmatpush.msra.mxu0 0.0
        %1339 = vmatpush.msra.mxu0 0.0
        %1340 = vmatpush.msra.mxu0 0.0
        %1341 = vmatpush.msra.mxu0 0.0
        %1342 = vmatpush.msra.mxu0 0.0
        %1343 = vmatpush.msra.mxu0 0.0
        %1344 = vmatpush.msra.mxu0 0.0
        %1345 = vmatpush.msra.mxu0 0.0
        %1346 = vmatpush.msra.mxu0 0.0
        %1347 = vmatpush.msra.mxu0 0.0
        %1348 = vmatpush.msra.mxu0 1.0
        %1349 = vmatmul.f32.gmra.mxu0 %v1331
        %v1350 = vpop.f32.mrf.mxu0
        %v1351 = vadd.f32 0.0, %v1350
        %1352 = vdwg.mxu0
        %v1353 = vmul.f32 %v305, %v305
        %v1354 = vsel %vm432, %v1353, 0.0
        %v1355 = vrot.slane %v1354, 4
        %v1356 = vadd.f32 %v1354, %v1355
        %v1357 = vrot.slane %v1356, 2
        %v1358 = vadd.f32 %v1356, %v1357
        %v1359 = vrot.slane %v1358, 1
        %v1360 = vadd.f32 %v1358, %v1359
        %1361 = vxpose.xlu0.b32.start [1/16] %v304, 128
        %1362 = vxpose.xlu0.b32.cont [2/16] 0.0, 128
        %1363 = vxpose.xlu0.b32.cont [3/16] 0.0, 128
        %1364 = vxpose.xlu0.b32.cont [4/16] 0.0, 128
        %1365 = vxpose.xlu0.b32.cont [5/16] 0.0, 128
        %1366 = vxpose.xlu0.b32.cont [6/16] 0.0, 128
        %1367 = vxpose.xlu0.b32.cont [7/16] 0.0, 128
        %1368 = vxpose.xlu0.b32.cont [8/16] 0.0, 128
        %1369 = vxpose.xlu0.b32.cont [9/16] 0.0, 128
        %1370 = vxpose.xlu0.b32.cont [10/16] 0.0, 128
        %1371 = vxpose.xlu0.b32.cont [11/16] 0.0, 128
        %1372 = vxpose.xlu0.b32.cont [12/16] 0.0, 128
        %1373 = vxpose.xlu0.b32.cont [13/16] 0.0, 128
        %1374 = vxpose.xlu0.b32.cont [14/16] 0.0, 128
        %1375 = vxpose.xlu0.b32.cont [15/16] 0.0, 128
        %1376 = vxpose.xlu0.b32.end [16/16] 0.0, 128
        %v1377 = vpop.trf.xlu0
        %v1378 = vpop.trf.xlu0
        %v1379 = vpop.trf.xlu0
        %v1380 = vpop.trf.xlu0
        %v1381 = vpop.trf.xlu0
        %v1382 = vpop.trf.xlu0
        %v1383 = vpop.trf.xlu0
        %v1384 = vpop.trf.xlu0
        %v1385 = vpop.trf.xlu0
        %v1386 = vpop.trf.xlu0
        %v1387 = vpop.trf.xlu0
        %v1388 = vpop.trf.xlu0
        %v1389 = vpop.trf.xlu0
        %v1390 = vpop.trf.xlu0
        %v1391 = vpop.trf.xlu0
        %v1392 = vpop.trf.xlu0
        %v1394 = vsel %vm432, %v1377, 0
        %1396 = vmatpush.msra.mxu0 0.0
        %1397 = vmatpush.msra.mxu0 0.0
        %1398 = vmatpush.msra.mxu0 0.0
        %1399 = vmatpush.msra.mxu0 0.0
        %1400 = vmatpush.msra.mxu0 0.0
        %1401 = vmatpush.msra.mxu0 0.0
        %1402 = vmatpush.msra.mxu0 0.0
        %1403 = vmatpush.msra.mxu0 0.0
        %1404 = vmatpush.msra.mxu0 0.0
        %1405 = vmatpush.msra.mxu0 0.0
        %1406 = vmatpush.msra.mxu0 0.0
        %1407 = vmatpush.msra.mxu0 0.0
        %1408 = vmatpush.msra.mxu0 0.0
        %1409 = vmatpush.msra.mxu0 0.0
        %1410 = vmatpush.msra.mxu0 0.0
        %1411 = vmatpush.msra.mxu0 %v305
        %1412 = vmatmul.f32.gmra.mxu0 %v1394
        %v1413 = vpop.f32.mrf.mxu0
        %v1414 = vadd.f32 0.0, %v1413
        %1415 = vdwg.mxu0
        %1417 = vset.pattern.permute.xlu0 0
        %1418 = vperm.xlu0 %1417, %v1351
        %v1419 = vpop.permute.xlu0 %1418
        %v1421 = vadd.f32 %v1419, %v1360
        %v1422 = vmul.f32 %v1414, 2.0
        %v1423 = vsub.f32 %v1421, %v1422
        %v1424 = vmax.f32 %v1423, 0.0
        %v1425 = vrsqrt.pop %v1424
        %v1426 = vmul.f32 %v1425, %v1424
        %v1427 = vmul.f32 %v1426, %v1425
        %v1428 = vmul.f32 0.5, %v1427
        %v1429 = vsub.f32 1.5, %v1428
        %v1430 = vmul.f32 %v1425, %v1429
        %v1431 = vmul.f32 %v1424, %v1430
        %vm1432 = vcmp.eq.f32.partialorder %v1424, inf
        %v1433 = vsel %vm1432, %v1424, %v1431
        %vm1434 = vcmp.eq.f32.partialorder %v1424, 0.0
        %v1435 = vand.u32 %v1424, 2147483648
        %v1436 = vsel %vm1434, %v1435, %v1433
        %v1438 = vsel %vm432, %v801, 0
        %v1441 = vsel %vm432, %v802, 0
        %v1444 = vsel %vm432, %v803, 0
        %v1447 = vsel %vm432, %v804, 0
        %v1450 = vsel %vm432, %v805, 0
        %v1453 = vsel %vm432, %v806, 0
        %v1456 = vsel %vm432, %v807, 0
        %v1459 = vsel %vm432, %v808, 0
        %1461 = vmatpush.msra.mxu0 0.0
        %1462 = vmatpush.msra.mxu0 0.0
        %1463 = vmatpush.msra.mxu0 0.0
        %1464 = vmatpush.msra.mxu0 0.0
        %1465 = vmatpush.msra.mxu0 0.0
        %1466 = vmatpush.msra.mxu0 0.0
        %1467 = vmatpush.msra.mxu0 0.0
        %1468 = vmatpush.msra.mxu0 0.0
        %1469 = vmatpush.msra.mxu0 0.0
        %1470 = vmatpush.msra.mxu0 0.0
        %1471 = vmatpush.msra.mxu0 0.0
        %1472 = vmatpush.msra.mxu0 0.0
        %1473 = vmatpush.msra.mxu0 0.0
        %1474 = vmatpush.msra.mxu0 0.0
        %1475 = vmatpush.msra.mxu0 0.0
        %1476 = vmatpush.msra.mxu0 %v1436
        %1477 = vmatmul.f32.gmra.mxu0 %v1438
        %v1478 = vpop.f32.mrf.mxu0
        %v1479 = vadd.f32 0.0, %v1478
        %1480 = vmatmul.f32.gmra.mxu0 %v1441
        %v1481 = vpop.f32.mrf.mxu0
        %v1482 = vadd.f32 0.0, %v1481
        %1483 = vmatmul.f32.gmra.mxu0 %v1444
        %v1484 = vpop.f32.mrf.mxu0
        %v1485 = vadd.f32 0.0, %v1484
        %1486 = vmatmul.f32.gmra.mxu0 %v1447
        %v1487 = vpop.f32.mrf.mxu0
        %v1488 = vadd.f32 0.0, %v1487
        %1489 = vmatmul.f32.gmra.mxu0 %v1450
        %v1490 = vpop.f32.mrf.mxu0
        %v1491 = vadd.f32 0.0, %v1490
        %1492 = vmatmul.f32.gmra.mxu0 %v1453
        %v1493 = vpop.f32.mrf.mxu0
        %v1494 = vadd.f32 0.0, %v1493
        %1495 = vmatmul.f32.gmra.mxu0 %v1456
        %v1496 = vpop.f32.mrf.mxu0
        %v1497 = vadd.f32 0.0, %v1496
        %1498 = vmatmul.f32.gmra.mxu0 %v1459
        %v1499 = vpop.f32.mrf.mxu0
        %v1500 = vadd.f32 0.0, %v1499
        %1501 = vdwg.mxu0
        %v1502 = vmul.f32 %v1479, %v1289
        %v1503 = vmul.f32 %v1482, %v1290
        %v1504 = vmul.f32 %v1485, %v1291
        %v1505 = vmul.f32 %v1488, %v1292
        %v1506 = vmul.f32 %v1491, %v1293
        %v1507 = vmul.f32 %v1494, %v1294
        %v1508 = vmul.f32 %v1497, %v1295
        %v1509 = vmul.f32 %v1500, %v1296
        %v1510 = vsel %vm432, %v1502, 0.0
        %1511 = vadd.xlane.f32.xlu0 %v1510
        %v1512 = vpop.xlane.xlu0 %1511
        %v1513 = vsel %vm432, %v1503, 0.0
        %1514 = vadd.xlane.f32.xlu0 %v1513
        %v1515 = vpop.xlane.xlu0 %1514
        %v1516 = vsel %vm432, %v1504, 0.0
        %1517 = vadd.xlane.f32.xlu0 %v1516
        %v1518 = vpop.xlane.xlu0 %1517
        %v1519 = vsel %vm432, %v1505, 0.0
        %1520 = vadd.xlane.f32.xlu0 %v1519
        %v1521 = vpop.xlane.xlu0 %1520
        %v1522 = vsel %vm432, %v1506, 0.0
        %1523 = vadd.xlane.f32.xlu0 %v1522
        %v1524 = vpop.xlane.xlu0 %1523
        %v1525 = vsel %vm432, %v1507, 0.0
        %1526 = vadd.xlane.f32.xlu0 %v1525
        %v1527 = vpop.xlane.xlu0 %1526
        %v1528 = vsel %vm432, %v1508, 0.0
        %1529 = vadd.xlane.f32.xlu0 %v1528
        %v1530 = vpop.xlane.xlu0 %1529
        %v1531 = vsel %vm432, %v1509, 0.0
        %1532 = vadd.xlane.f32.xlu0 %v1531
        %v1533 = vpop.xlane.xlu0 %1532
        %v1542 = vperm.slane %v1512, %v374
        %v1543 = vperm.slane %v1515, %v374
        %v1544 = vperm.slane %v1518, %v374
        %v1545 = vperm.slane %v1521, %v374
        %v1546 = vperm.slane %v1524, %v374
        %v1547 = vperm.slane %v1527, %v374
        %v1548 = vperm.slane %v1530, %v374
        %v1549 = vperm.slane %v1533, %v374
        %vm1550 = vcmask 1041409
        %v1551 = vsel %vm1550, %v1543, %v1542
        %vm1552 = vcmask 1042434
        %v1553 = vsel %vm1552, %v1544, %v1551
        %vm1554 = vcmask 1043459
        %v1555 = vsel %vm1554, %v1545, %v1553
        %vm1556 = vcmask 1044484
        %v1557 = vsel %vm1556, %v1546, %v1555
        %vm1558 = vcmask 1045509
        %v1559 = vsel %vm1558, %v1547, %v1557
        %vm1560 = vcmask 1046534
        %v1561 = vsel %vm1560, %v1548, %v1559
        %vm1562 = vcmask 1047559
        %v1563 = vsel %vm1562, %v1549, %v1561
        %v1565 = vsel %vm432, %v1563, 0.0
        %1566 = vadd.xlane.f32.xlu0 %v1565
        %v1567 = vpop.xlane.xlu0 %1566
        %v1568 = vrot.slane %v1567, 4
        %v1569 = vmin.f32 %v1567, %v1568
        %v1570 = vrot.slane %v1569, 2
        %v1571 = vmin.f32 %v1569, %v1570
        %v1572 = vrot.slane %v1571, 1
        %v1573 = vmin.f32 %v1571, %v1572
        %v1574 = vsub.f32 %v1567, %v1573
        %v1575 = vmul.f32 %v1574, -0.03535534
        %v1576 = vmul.f32 %v1575, 1.442695
        %v1577 = vpow.pop %v1576
        %v1578 = vrot.slane %v1577, 4
        %v1579 = vadd.f32 %v1577, %v1578
        %v1580 = vrot.slane %v1579, 2
        %v1581 = vadd.f32 %v1579, %v1580
        %v1582 = vrot.slane %v1581, 1
        %v1583 = vadd.f32 %v1581, %v1582
        %v1584 = vrcp.pop %v1583
        %v1585 = vmul.f32 %v1583, %v1584
        %v1586 = vsub.f32 1.0, %v1585
        %v1587 = vmul.f32 %v1584, %v1586
        %v1588 = vadd.f32 %v1584, %v1587
        %vm1589 = vweird.f32 %v1583
        %vm1590 = vweird.f32 %v1584
        %vm1591 = vmor %vm1589, %vm1590
        %v1592 = vsel %vm1591, %v1584, %v1588
        %v1593 = vand.u32 2147483647, %v1583
        %vm1594 = vcmp.eq.f32.partialorder %v1593, 8.507059e+37
        %v1595 = vand.u32 %v1583, 2147483648
        %v1596 = vor.u32 1.1754944e-38, %v1595
        %v1597 = vsel %vm1594, %v1596, %v1592
        %v1598 = vmul.f32 8.0, %v1597
        %v1599 = vmul.f32 %v1577, %v1598
        %v1601 = vperm.slane %v1599, 0
        %v1602 = vperm.slane %v1599, 1
        %v1603 = vperm.slane %v1599, 2
        %v1604 = vperm.slane %v1599, 3
        %v1605 = vperm.slane %v1599, 4
        %v1606 = vperm.slane %v1599, 5
        %v1607 = vperm.slane %v1599, 6
        %v1608 = vperm.slane %v1599, 7
        %v1617 = vmul.f32 %v801, %v1601
        %v1618 = vmul.f32 %v802, %v1602
        %v1619 = vmul.f32 %v803, %v1603
        %v1620 = vmul.f32 %v804, %v1604
        %v1621 = vmul.f32 %v805, %v1605
        %v1622 = vmul.f32 %v806, %v1606
        %v1623 = vmul.f32 %v807, %v1607
        %v1624 = vmul.f32 %v808, %v1608
        %1625 = vxpose.xlu0.b32.start [1/16] %v1617, 128
        %1626 = vxpose.xlu0.b32.cont [2/16] %v1618, 128
        %1627 = vxpose.xlu0.b32.cont [3/16] %v1619, 128
        %1628 = vxpose.xlu0.b32.cont [4/16] %v1620, 128
        %1629 = vxpose.xlu0.b32.cont [5/16] %v1621, 128
        %1630 = vxpose.xlu0.b32.cont [6/16] %v1622, 128
        %1631 = vxpose.xlu0.b32.cont [7/16] %v1623, 128
        %1632 = vxpose.xlu0.b32.cont [8/16] %v1624, 128
        %1633 = vxpose.xlu0.b32.cont [9/16] 0.0, 128
        %1634 = vxpose.xlu0.b32.cont [10/16] 0.0, 128
        %1635 = vxpose.xlu0.b32.cont [11/16] 0.0, 128
        %1636 = vxpose.xlu0.b32.cont [12/16] 0.0, 128
        %1637 = vxpose.xlu0.b32.cont [13/16] 0.0, 128
        %1638 = vxpose.xlu0.b32.cont [14/16] 0.0, 128
        %1639 = vxpose.xlu0.b32.cont [15/16] 0.0, 128
        %1640 = vxpose.xlu0.b32.end [16/16] 0.0, 128
        %v1641 = vpop.trf.xlu0
        %v1642 = vpop.trf.xlu0
        %v1643 = vpop.trf.xlu0
        %v1644 = vpop.trf.xlu0
        %v1645 = vpop.trf.xlu0
        %v1646 = vpop.trf.xlu0
        %v1647 = vpop.trf.xlu0
        %v1648 = vpop.trf.xlu0
        %v1649 = vpop.trf.xlu0
        %v1650 = vpop.trf.xlu0
        %v1651 = vpop.trf.xlu0
        %v1652 = vpop.trf.xlu0
        %v1653 = vpop.trf.xlu0
        %v1654 = vpop.trf.xlu0
        %v1655 = vpop.trf.xlu0
        %v1656 = vpop.trf.xlu0
        %vm1657 = vcmask 523264
        %v1659 = vsel %vm1657, %v1641, 0
        %1661 = vmatpush.msra.mxu0 0.0
        %1662 = vmatpush.msra.mxu0 0.0
        %1663 = vmatpush.msra.mxu0 0.0
        %1664 = vmatpush.msra.mxu0 0.0
        %1665 = vmatpush.msra.mxu0 0.0
        %1666 = vmatpush.msra.mxu0 0.0
        %1667 = vmatpush.msra.mxu0 0.0
        %1668 = vmatpush.msra.mxu0 0.0
        %1669 = vmatpush.msra.mxu0 %v1296
        %1670 = vmatpush.msra.mxu0 %v1295
        %1671 = vmatpush.msra.mxu0 %v1294
        %1672 = vmatpush.msra.mxu0 %v1293
        %1673 = vmatpush.msra.mxu0 %v1292
        %1674 = vmatpush.msra.mxu0 %v1291
        %1675 = vmatpush.msra.mxu0 %v1290
        %1676 = vmatpush.msra.mxu0 %v1289
        %1677 = vmatmul.f32.gmra.mxu0 %v1659
        %v1678 = vpop.f32.mrf.mxu0
        %v1679 = vadd.f32 0.0, %v1678
        %1680 = vdwg.mxu0
        %v1682 = vsel %vm432, %v1679, 0
        %1684 = vmatpush.msra.mxu0 0.0
        %1685 = vmatpush.msra.mxu0 0.0
        %1686 = vmatpush.msra.mxu0 0.0
        %1687 = vmatpush.msra.mxu0 0.0
        %1688 = vmatpush.msra.mxu0 0.0
        %1689 = vmatpush.msra.mxu0 0.0
        %1690 = vmatpush.msra.mxu0 0.0
        %1691 = vmatpush.msra.mxu0 0.0
        %1692 = vmatpush.msra.mxu0 0.0
        %1693 = vmatpush.msra.mxu0 0.0
        %1694 = vmatpush.msra.mxu0 0.0
        %1695 = vmatpush.msra.mxu0 0.0
        %1696 = vmatpush.msra.mxu0 0.0
        %1697 = vmatpush.msra.mxu0 0.0
        %1698 = vmatpush.msra.mxu0 0.0
        %1699 = vmatpush.msra.mxu0 %v306
        %1700 = vmatmul.f32.gmra.mxu0 %v1682
        %v1701 = vpop.f32.mrf.mxu0
        %v1702 = vadd.f32 0.0, %v1701
        %1703 = vdwg.mxu0
        %1704 = vst.msk [vmem:[%s261] sm:$0xff] %vm432, %v1679
        %1705 = vst.msk [vmem:[%s303] sm:$0xff] %vm432, %v1702
        %s1706 = sand.u32 %s125, 1
        %s1707 = scalar_lea.sflag [#allocation3], %s1706
        %s1708 = sand.u32 %s125, 1
        %s1709 = smul.addr %s1708, 8
        %s1710 = scalar_lea.vmem [#allocation2], %s1709
        %p1711 = scmp.lt.s32.totalorder %s23, 1
        %s1712 = scalar_select %p1711, %s23, 1
        %p1713 = scmp.lt.s32.totalorder %s24, 3
        %s1714 = scalar_select %p1713, %s24, 3
        %s1715 = smul.addr %s1712, 4
        %s1716 = sadd.s32 %s1714, %s1715
        %s1717 = smul.addr %s1716, 8
        %s1718 = scalar_lea.vmem %s4, %s1717
        // Predicated region
        $region33: #{esp_attention_forward.1} parent=31 // pred_check
          %p1719 = pneg %p135
        $region34: #{esp_attention_forward.1} parent=31 // pred_check_branch
          %1721 = sbr.rel (%p1719) target = $region36
        $region35: #{esp_attention_forward.1} parent=31 // pred_region
          %1723 = vsyncadd %s1707, 0
          %s1724 = smul.addr %s23, 4
          %s1725 = sadd.s32 %s24, %s1724
          %s1726 = smul.addr %s1725, 8
          %s1727 = scalar_lea.hbm %s3, %s1726
          %s1729 = sshll.u32 %s1710, 4
          %s1730 = int_to_ptr.vmem [resolvable:$true] %s1729
          %s1731 = sshll.u32 %s1727, 4
          %s1732 = int_to_ptr.hbm [resolvable:$true] %s1731
          %1734 = dma.vmem_to_hbm [thread:$0]  %s1730, 128, %s1732, %s1707
        $region36: #{esp_attention_forward.1} parent=31 // pred_fallthru
          _
        // Predicated region
        $region37: #{esp_attention_forward.1} parent=31 // pred_check
          %p1735 = pneg %p163
        $region38: #{esp_attention_forward.1} parent=31 // pred_check_branch
          %1737 = sbr.rel (%p1735) target = $region40
        $region39: #{esp_attention_forward.1} parent=31 // pred_region
          _
        $region40: #{esp_attention_forward.1} parent=31 // pred_fallthru
          _
      $region32: #{esp_attention_forward.1} parent=5 // pred_fallthru
        _
      %p1738 = scmp.le.s32.totalorder 2, %s14
      // Predicated region
      $region41: #{esp_attention_forward.1} parent=5 // pred_check
        %p1739 = pneg %p1738
      $region42: #{esp_attention_forward.1} parent=5 // pred_check_branch
        %1741 = sbr.rel (%p1739) target = $region44
      $region43: #{esp_attention_forward.1} parent=5 // pred_region
        %s1742 = ssub.s32 %s14, 2
        // Predicated region
        $region45: #{esp_attention_forward.1} parent=43 // pred_check
          %p1743 = pneg %p141
        $region46: #{esp_attention_forward.1} parent=43 // pred_check_branch
          %1745 = sbr.rel (%p1743) target = $region48
        $region47: #{esp_attention_forward.1} parent=43 // pred_region
          %s1746 = sand.u32 %s126, 1
          %s1747 = scalar_lea.sflag [#allocation3], %s1746
          %s1748 = sand.u32 %s126, 1
          %s1749 = smul.addr %s1748, 8
          %s1750 = scalar_lea.vmem [#allocation2], %s1749
          %1752 = dma.done %s1747, 128
        $region48: #{esp_attention_forward.1} parent=43 // pred_fallthru
          _
        // Predicated region
        $region49: #{esp_attention_forward.1} parent=43 // pred_check
          %p1753 = pneg %p169
        $region50: #{esp_attention_forward.1} parent=43 // pred_check_branch
          %1755 = sbr.rel (%p1753) target = $region52
        $region51: #{esp_attention_forward.1} parent=43 // pred_region
          %p1756 = scmp.lt.s32.totalorder %s25, 1
          %s1757 = scalar_select %p1756, %s25, 1
          %p1758 = scmp.lt.s32.totalorder %s26, 3
          %s1759 = scalar_select %p1758, %s26, 3
          %s1760 = smul.addr %s1757, 4
          %s1761 = sadd.s32 %s1759, %s1760
          %s1762 = smul.addr %s1761, 8
          %s1763 = scalar_lea.vmem %s4, %s1762
        $region52: #{esp_attention_forward.1} parent=43 // pred_fallthru
          _
      $region44: #{esp_attention_forward.1} parent=5 // pred_fallthru
        _
    $region6: #{esp_attention_forward.1} parent=1 // loop_footer
      %s18 = sadd.s32 1, %s14
    $region7: #{esp_attention_forward.1} parent=1 // loop_footer_branch
      %13 = sbr.rel target = $region3
    $region8: #{esp_attention_forward.1} parent=1 // loop_exit
      _
    %1764 = vsyncpa [#allocation3], 1
    %s1765 = scalar_lea.sflag [#allocation3], 1
    %1766 = vsyncpa %s1765, 1

</llo_original>
